<compile_context>
chip_gen: v6e
topology: v6e:2x2x1
jax: 0.10.0
libtpu: 0.0.40
codegen_flags: <defaults>
</compile_context>

<pallas_src>
import functools

import jax
import jax.numpy as jnp
from jax import lax
from jax.experimental import pallas as pl
from jax.experimental.pallas import tpu as pltpu

LN_EPS = 1e-5     # torch.nn.LayerNorm default eps
L2_EPS = 1e-12    # torch.nn.functional.normalize default eps
LANE = 128
DEFAULT_VMEM_LIMIT = 48 * 1024 * 1024   # fits v5e/v6e (128 MiB) and v7x (64 MiB)


def _round_up(n, m):
    return ((n + m - 1) // m) * m


def _pad2(a, rows, cols):
    """Zero-pad a 2D array up to (rows, cols)."""
    return jnp.pad(a, ((0, rows - a.shape[0]), (0, cols - a.shape[1])))


def _pick_tile(n, max_tile):
    """Largest tile <= max_tile that divides n (multiple of 8 when < n)."""
    if n <= max_tile:
        return n
    for t in range(max_tile, 0, -1):
        if n % t == 0 and t % 8 == 0:
            return t
    return n


# ----------------------------------------------------------------------------
# Kernel 1: MLP trunk (Linear -> LN -> Tanh -> Linear -> ReLU -> Linear [-> L2])
#           with the input concat fused as a sum of per-input partial matmuls.
# ----------------------------------------------------------------------------
def _mlp_kernel(*refs, n_in, l2_head, hidden_real, matmul_dtype):
    out_ref = refs[-1]
    vec_ref, w2_ref, w3_ref, b3_ref = refs[2 * n_in: 2 * n_in + 4]

    vecs = vec_ref[...]                 # (4, Hp) f32 : rows = [b1, g1, be1, b2]
    b1, g1, be1, b2 = vecs[0:1], vecs[1:2], vecs[2:3], vecs[3:4]

    # Linear 1: fused concat == sum of per-input matmuls (bf16 MXU, f32 acc).
    h = None
    for k in range(n_in):
        x = refs[2 * k][...].astype(matmul_dtype)          # (tb, d_k)
        part = jnp.dot(x, refs[2 * k + 1][...],            # (d_k, Hp)
                       preferred_element_type=jnp.float32)
        h = part if h is None else h + part
    h = h + b1                                             # padded lanes stay 0

    # Masked / fused LayerNorm over the real hidden width.
    # Padded lanes of h are exactly 0, so the sums equal the real-column sums;
    # divide by the real H and let zero-padded gamma/beta re-zero padded lanes.
    inv_h = 1.0 / float(hidden_real)
    m = jnp.sum(h, axis=-1, keepdims=True) * inv_h
    ms = jnp.sum(h * h, axis=-1, keepdims=True) * inv_h
    var = jnp.maximum(ms - m * m, 0.0)
    h = (h - m) * lax.rsqrt(var + LN_EPS) * g1 + be1
    h = jnp.tanh(h)

    # Linear 2 + ReLU
    h = jnp.dot(h.astype(matmul_dtype), w2_ref[...],
                preferred_element_type=jnp.float32) + b2
    h = jnp.maximum(h, 0.0)

    # Linear 3
    y = jnp.dot(h.astype(matmul_dtype), w3_ref[...],
                preferred_element_type=jnp.float32) + b3_ref[...]

    if l2_head:  # F.normalize: x / max(||x||, eps) == x * rsqrt(max(||x||^2, eps^2))
        ssq = jnp.sum(y * y, axis=-1, keepdims=True)
        y = y * lax.rsqrt(jnp.maximum(ssq, L2_EPS * L2_EPS))

    out_ref[...] = y.astype(out_ref.dtype)


def _mlp_forward(xs, p, *, l2_head, matmul_dtype, batch_tile, vmem_limit_bytes):
    """xs: list of input arrays whose columns are the (virtual) concat of w1 rows."""
    bsz = xs[0].shape[0]
    dins = [x.shape[1] for x in xs]
    hid = p["w2"].shape[0]
    zd = p["w3"].shape[1]
    hp = _round_up(hid, LANE)           # lane-dense hidden
    zp = _round_up(zd, LANE)            # lane-dense output
    tb = _pick_tile(bsz, batch_tile)

    # Split w1 into per-input row blocks (fused concat) and zero-pad/cast all
    # weights once in the wrapper so the VMEM-resident copies (and the HBM DMA)
    # are already lane-aligned and in the MXU dtype.
    w1 = p["w1"]
    w1_parts, off = [], 0
    for d in dins:
        w1_parts.append(_pad2(w1[off:off + d], d, hp).astype(matmul_dtype))
        off += d
    vecs = _pad2(p["vecs"], 4, hp)                          # g1/be1 pad to 0 (masked LN)
    w2 = _pad2(p["w2"], hp, hp).astype(matmul_dtype)
    w3 = _pad2(p["w3"], hp, zp).astype(matmul_dtype)
    b3 = _pad2(p["b3"], 1, zp)

    in_arrays, in_specs = [], []
    for x, w1p, d in zip(xs, w1_parts, dins):
        in_arrays += [x, w1p]
        in_specs += [pl.BlockSpec((tb, d), lambda i: (i, 0)),   # activations: streamed
                     pl.BlockSpec((d, hp), lambda i: (0, 0))]   # weights: VMEM-resident
    in_arrays += [vecs, w2, w3, b3]
    in_specs += [pl.BlockSpec((4, hp), lambda i: (0, 0)),       # [b1, g1, be1, b2]
                 pl.BlockSpec((hp, hp), lambda i: (0, 0)),
                 pl.BlockSpec((hp, zp), lambda i: (0, 0)),
                 pl.BlockSpec((1, zp), lambda i: (0, 0))]

    kern = functools.partial(_mlp_kernel, n_in=len(xs), l2_head=l2_head,
                             hidden_real=hid, matmul_dtype=matmul_dtype)
    return pl.pallas_call(
        kern,
        out_shape=jax.ShapeDtypeStruct((bsz, zp), jnp.float32),
        grid_spec=pltpu.PrefetchScalarGridSpec(
            num_scalar_prefetch=0,
            grid=(bsz // tb,),
            in_specs=in_specs,
            out_specs=pl.BlockSpec((tb, zp), lambda i: (i, 0)),
        ),
        compiler_params=pltpu.CompilerParams(
            dimension_semantics=("parallel",),               # megacore on v7x
            vmem_limit_bytes=vmem_limit_bytes),
    )(*in_arrays)


# ----------------------------------------------------------------------------
# Kernel 2: Gram losses over a (qi, kj) tile grid with a scalar accumulator.
#           Cov is symmetric -> only upper-triangle blocks run the Cov matmul.
# ----------------------------------------------------------------------------
def _svd_loss_kernel(phi_q_ref, phi_k_ref, mu_k_ref, out_ref, *, batch, matmul_dtype):
    i = pl.program_id(0)
    j = pl.program_id(1)

    @pl.when((i == 0) & (j == 0))
    def _init():
        out_ref[...] = jnp.zeros_like(out_ref)

    phi_q = phi_q_ref[...]              # (tq, z) f32, rows of the i-th tile
    mu_k = mu_k_ref[...]                # (tk, z) f32, rows of the j-th tile

    inv_diag = 1.0 / float(batch)
    inv_off = 1.0 / float(max(batch * batch - batch, 1))   # guard B==1 (degenerate)

    # Contract feature axes directly (no .T / XLU transpose).
    dn = (((1,), (1,)), ((), ()))
    pq = phi_q.astype(matmul_dtype)
    P = lax.dot_general(pq, mu_k.astype(matmul_dtype), dn,
                        preferred_element_type=jnp.float32)        # (tq, tk)
    out_ref[...] += jnp.sum(P * P, keepdims=True) * inv_off

    # Cov = phi phi^T is symmetric: compute only blocks with i <= j and count
    # strictly-upper blocks twice; i > j blocks skip the matmul entirely.
    @pl.when(i <= j)
    def _cov():
        phi_k = phi_k_ref[...]
        C = lax.dot_general(pq, phi_k.astype(matmul_dtype), dn,
                            preferred_element_type=jnp.float32)    # (tq, tk)
        w = jnp.where(i == j, inv_off, 2.0 * inv_off)
        out_ref[...] += jnp.sum(C * C, keepdims=True) * w

    # Diagonal entries live only in diagonal blocks (same row range on both sides).
    @pl.when(i == j)
    def _diag():
        dP = jnp.sum(phi_q * mu_k, axis=-1, keepdims=True)      # (tq,1) = diag(P) rows
        dC = jnp.sum(phi_q * phi_q, axis=-1, keepdims=True)     # (tq,1) = diag(Cov) rows
        tr = jnp.sum(dP + dC, axis=0, keepdims=True)            # (1,1)
        sq = jnp.sum(dP * dP + dC * dC, axis=0, keepdims=True)  # (1,1)
        out_ref[...] += (-2.0 * inv_diag) * tr - inv_off * sq


def _svd_loss(phi, mu, *, matmul_dtype, gram_tile, vmem_limit_bytes):
    bsz, zd = phi.shape                 # zd may be lane-padded; padded cols are 0
    t = _pick_tile(bsz, gram_tile)
    n = bsz // t
    kern = functools.partial(_svd_loss_kernel, batch=bsz, matmul_dtype=matmul_dtype)
    out = pl.pallas_call(
        kern,
        out_shape=jax.ShapeDtypeStruct((1, 1), jnp.float32),
        grid_spec=pltpu.PrefetchScalarGridSpec(
            num_scalar_prefetch=0,
            grid=(n, n),
            in_specs=[
                pl.BlockSpec((t, zd), lambda i, j: (i, 0)),   # phi, query tile
                pl.BlockSpec((t, zd), lambda i, j: (j, 0)),   # phi, key tile
                pl.BlockSpec((t, zd), lambda i, j: (j, 0)),   # mu,  key tile
            ],
            out_specs=pl.BlockSpec((1, 1), lambda i, j: (0, 0)),  # resident accumulator
        ),
        compiler_params=pltpu.CompilerParams(
            dimension_semantics=("arbitrary", "arbitrary"),
            vmem_limit_bytes=vmem_limit_bytes),
    )(phi, phi, mu)
    return out


# ----------------------------------------------------------------------------
# Public wrapper
# ----------------------------------------------------------------------------
def svd_learner_loss(obs, action, next_obs, params,
                     matmul_dtype=jnp.bfloat16,
                     batch_tile=256, gram_tile=256,
                     vmem_limit_bytes=DEFAULT_VMEM_LIMIT):
    # The obs/action concat is fused into the feature-net kernel (split w1);
    # phi / mu come back lane-padded with exact zeros, which leaves the Gram
    # contractions, diagonals and the L2 norm unchanged.
    phi = _mlp_forward([obs, action], params["feature"], l2_head=True,
                       matmul_dtype=matmul_dtype, batch_tile=batch_tile,
                       vmem_limit_bytes=vmem_limit_bytes)
    mu = _mlp_forward([next_obs], params["mu"], l2_head=False,
                      matmul_dtype=matmul_dtype, batch_tile=batch_tile,
                      vmem_limit_bytes=vmem_limit_bytes)
    loss = _svd_loss(phi, mu, matmul_dtype=matmul_dtype, gram_tile=gram_tile,
                     vmem_limit_bytes=vmem_limit_bytes)
    return loss[0, 0]


# ----------------------------------------------------------------------------
# Deterministic synthetic parameters (same shapes as the PyTorch module)
# ----------------------------------------------------------------------------
def init_params(key, obs_dim, action_dim, z_dim, hidden_dim):
    keys = jax.random.split(key, 16)

    def lin(kw, kb, din, dout):
        w = jax.random.normal(kw, (din, dout), jnp.float32) / jnp.sqrt(jnp.float32(din))
        b = 0.1 * jax.random.normal(kb, (1, dout), jnp.float32)
        return w, b

    def net(ks, din):
        w1, b1 = lin(ks[0], ks[1], din, hidden_dim)
        g1 = 1.0 + 0.1 * jax.random.normal(ks[2], (1, hidden_dim), jnp.float32)
        be1 = 0.1 * jax.random.normal(ks[3], (1, hidden_dim), jnp.float32)
        w2, b2 = lin(ks[4], ks[5], hidden_dim, hidden_dim)
        w3, b3 = lin(ks[6], ks[7], hidden_dim, z_dim)
        vecs = jnp.concatenate([b1, g1, be1, b2], axis=0)   # (4, H)
        return dict(w1=w1, vecs=vecs, w2=w2, w3=w3, b3=b3)

    return dict(feature=net(keys[:8], obs_dim + action_dim),
                mu=net(keys[8:], obs_dim))


# ----------------------------------------------------------------------------
# Pure-JAX reference: faithful to the PyTorch module (masks, two-pass LN, sqrt)
# ----------------------------------------------------------------------------
def reference_loss(obs, action, next_obs, params, matmul_dtype=jnp.float32):
    def dot(a, b):
        return jnp.dot(a.astype(matmul_dtype), b.astype(matmul_dtype),
                       preferred_element_type=jnp.float32,
                       precision=lax.Precision.HIGHEST)

    def trunk(x, p):
        vecs = p["vecs"]
        b1, g1, be1, b2 = vecs[0:1], vecs[1:2], vecs[2:3], vecs[3:4]
        h = dot(x, p["w1"]) + b1
        m = jnp.mean(h, axis=-1, keepdims=True)
        v = jnp.mean((h - m) ** 2, axis=-1, keepdims=True)
        h = (h - m) / jnp.sqrt(v + LN_EPS) * g1 + be1
        h = jnp.tanh(h)
        h = jnp.maximum(dot(h, p["w2"]) + b2, 0.0)
        return dot(h, p["w3"]) + p["b3"]

    oa = jnp.concatenate([obs, action], axis=1)
    phi = trunk(oa, params["feature"])
    phi = phi / jnp.maximum(jnp.linalg.norm(phi, axis=-1, keepdims=True), L2_EPS)
    mu = trunk(next_obs, params["mu"])

    P = dot(phi, mu.T)
    bsz = P.shape[0]
    eye = jnp.eye(bsz, dtype=jnp.float32)
    off = 1.0 - eye
    n_off = bsz * bsz - bsz
    loss = -2.0 * jnp.sum(P * eye) / bsz + jnp.sum((P * off) ** 2) / n_off
    cov = dot(phi, phi.T)
    loss += jnp.sum((cov * off) ** 2) / n_off - 2.0 * jnp.sum(cov * eye) / bsz
    return loss


if __name__ == "__main__":
    # small shapes consistent with SVDLearner(obs_dim, action_dim, z_dim, hidden_dim)
    B, OBS_DIM, ACT_DIM, Z_DIM, HIDDEN = 8, 16, 8, 16, 32

    key = jax.random.PRNGKey(0)
    k_obs, k_act, k_next, k_par = jax.random.split(key, 4)
    obs = jax.random.normal(k_obs, (B, OBS_DIM), jnp.float32)
    action = jax.random.normal(k_act, (B, ACT_DIM), jnp.float32)
    next_obs = jax.random.normal(k_next, (B, OBS_DIM), jnp.float32)
    # future_obs is deleted inside SVDLearner.forward, so it is not an input here.

    params = init_params(k_par, OBS_DIM, ACT_DIM, Z_DIM, HIDDEN)
    ref = reference_loss(obs, action, next_obs, params)

    # Tight structural check: f32 matmuls validate the fused concat, masked LN
    # under lane padding, trace/Frobenius identities and symmetric-Cov tiling.
    f32_fn = jax.jit(lambda o, a, n, p: svd_learner_loss(o, a, n, p,
                                                         matmul_dtype=jnp.float32))
    loss_f32 = jax.block_until_ready(f32_fn(obs, action, next_obs, params))
    assert jnp.allclose(loss_f32, ref, atol=1e-3, rtol=1e-3), (loss_f32, ref)

    # Production path: bf16 at the MXU boundary (f32 accumulation & elementwise).
    bf16_fn = jax.jit(lambda o, a, n, p: svd_learner_loss(o, a, n, p,
                                                          matmul_dtype=jnp.bfloat16))
    loss_bf16 = jax.block_until_ready(bf16_fn(obs, action, next_obs, params))
    assert jnp.allclose(loss_bf16, ref, atol=5e-2, rtol=5e-2), (loss_bf16, ref)

    print("KERNEL_OK")
</pallas_src>

<mosaic_0001>
module attributes {stable_mosaic.version = 11 : i64} {
  func.func @_svd_loss_kernel(%arg0: i32, %arg1: i32, %arg2: memref<8x128xf32, #tpu.memory_space<vmem>>, %arg3: memref<8x128xf32, #tpu.memory_space<vmem>>, %arg4: memref<8x128xf32, #tpu.memory_space<vmem>>, %arg5: memref<1x1xf32, #tpu.memory_space<vmem>>) attributes {dimension_semantics = [#tpu.dimension_semantics<arbitrary>, #tpu.dimension_semantics<arbitrary>], iteration_bounds = array<i64: 1, 1>, scalar_prefetch = 0 : i64, scratch_operands = 0 : i64, tpu.core_type = #tpu.core_type<tc>, window_params = [{transform_indices = @transform_0, window_bounds = array<i64: 8, 128>}, {transform_indices = @transform_1, window_bounds = array<i64: 8, 128>}, {transform_indices = @transform_2, window_bounds = array<i64: 8, 128>}, {pipeline_mode = #tpu.pipeline_mode<synchronous>, transform_indices = @transform_3, window_bounds = array<i64: 1, 1>}]} {
    %c0_i32 = arith.constant 0 : i32
    %0 = arith.cmpi eq, %arg0, %c0_i32 : i32
    %c0_i32_0 = arith.constant 0 : i32
    %1 = arith.cmpi eq, %arg1, %c0_i32_0 : i32
    %2 = arith.andi %0, %1 : i1
    %3 = arith.extui %2 : i1 to i32
    %c0_i32_1 = arith.constant 0 : i32
    %4 = arith.cmpi ne, %3, %c0_i32_1 : i32
    scf.if %4 {
      %cst_13 = arith.constant 0.000000e+00 : f32
      %25 = vector.broadcast %cst_13 : f32 to vector<1x1xf32>
      %c0_14 = arith.constant 0 : index
      %c0_15 = arith.constant 0 : index
      %26 = vector.load %arg5[%c0_14, %c0_15] : memref<1x1xf32, #tpu.memory_space<vmem>>, vector<1x1xf32>
      tpu.vector_store %arg5[%c0_14, %c0_15], %25 {strides = array<i32>} : memref<1x1xf32, #tpu.memory_space<vmem>>, vector<1x1xf32>,
    } else {
    }
    %c0 = arith.constant 0 : index
    %c0_2 = arith.constant 0 : index
    %5 = vector.load %arg2[%c0, %c0_2] : memref<8x128xf32, #tpu.memory_space<vmem>>, vector<8x128xf32>
    %c0_3 = arith.constant 0 : index
    %c0_4 = arith.constant 0 : index
    %6 = vector.load %arg4[%c0_3, %c0_4] : memref<8x128xf32, #tpu.memory_space<vmem>>, vector<8x128xf32>
    %cst = arith.constant dense<0.000000e+00> : vector<8x8xf32>
    %7 = tpu.matmul %5, %6, %cst {dimension_numbers = #tpu.dot_dimension_numbers<[1], [1], [0], [0], [0, 0, 1, 0], [], []>} : vector<8x128xf32>, vector<8x128xf32>, vector<8x8xf32> -> vector<8x8xf32>
    %c0_5 = arith.constant 0 : index
    %c0_6 = arith.constant 0 : index
    %8 = vector.load %arg5[%c0_5, %c0_6] : memref<1x1xf32, #tpu.memory_space<vmem>>, vector<1x1xf32>
    %9 = arith.mulf %7, %7 : vector<8x8xf32>
    %10 = vector.shape_cast %9 : vector<8x8xf32> to vector<1x8x8xf32>
    %cst_7 = arith.constant dense<0.000000e+00> : vector<1xf32>
    %11 = vector.multi_reduction <add>, %10, %cst_7 [1, 2] : vector<1x8x8xf32> to vector<1xf32>
    %12 = vector.shape_cast %11 : vector<1xf32> to vector<1x1x1xf32>
    %13 = vector.extract %12[0, 0, 0] : f32 from vector<1x1x1xf32>
    %14 = vector.broadcast %13 : f32 to vector<1x1xf32>
    %cst_8 = arith.constant 0.0178571437 : f32
    %15 = vector.broadcast %cst_8 : f32 to vector<1x1xf32>
    %16 = arith.mulf %14, %15 : vector<1x1xf32>
    %17 = arith.addf %8, %16 : vector<1x1xf32>
    %c0_9 = arith.constant 0 : index
    %c0_10 = arith.constant 0 : index
    %18 = vector.load %arg5[%c0_9, %c0_10] : memref<1x1xf32, #tpu.memory_space<vmem>>, vector<1x1xf32>
    tpu.vector_store %arg5[%c0_9, %c0_10], %17 {strides = array<i32>} : memref<1x1xf32, #tpu.memory_space<vmem>>, vector<1x1xf32>,
    %19 = arith.cmpi sle, %arg0, %arg1 : i32
    %20 = arith.extui %19 : i1 to i32
    %c0_i32_11 = arith.constant 0 : i32
    %21 = arith.cmpi ne, %20, %c0_i32_11 : i32
    scf.if %21 {
      %c0_13 = arith.constant 0 : index
      %c0_14 = arith.constant 0 : index
      %25 = vector.load %arg3[%c0_13, %c0_14] : memref<8x128xf32, #tpu.memory_space<vmem>>, vector<8x128xf32>
      %cst_15 = arith.constant dense<0.000000e+00> : vector<8x8xf32>
      %26 = tpu.matmul %5, %25, %cst_15 {dimension_numbers = #tpu.dot_dimension_numbers<[1], [1], [0], [0], [0, 0, 1, 0], [], []>} : vector<8x128xf32>, vector<8x128xf32>, vector<8x8xf32> -> vector<8x8xf32>
      %27 = arith.cmpi eq, %arg0, %arg1 : i32
      %cst_16 = arith.constant 0.0178571437 : f32
      %cst_17 = arith.constant 0.0357142873 : f32
      %28 = arith.select %27, %cst_16, %cst_17 : f32
      %c0_18 = arith.constant 0 : index
      %c0_19 = arith.constant 0 : index
      %29 = vector.load %arg5[%c0_18, %c0_19] : memref<1x1xf32, #tpu.memory_space<vmem>>, vector<1x1xf32>
      %30 = arith.mulf %26, %26 : vector<8x8xf32>
      %31 = vector.shape_cast %30 : vector<8x8xf32> to vector<1x8x8xf32>
      %cst_20 = arith.constant dense<0.000000e+00> : vector<1xf32>
      %32 = vector.multi_reduction <add>, %31, %cst_20 [1, 2] : vector<1x8x8xf32> to vector<1xf32>
      %33 = vector.shape_cast %32 : vector<1xf32> to vector<1x1x1xf32>
      %34 = vector.extract %33[0, 0, 0] : f32 from vector<1x1x1xf32>
      %35 = vector.broadcast %34 : f32 to vector<1x1xf32>
      %36 = vector.broadcast %28 : f32 to vector<1x1xf32>
      %37 = arith.mulf %35, %36 : vector<1x1xf32>
      %38 = arith.addf %29, %37 : vector<1x1xf32>
      %c0_21 = arith.constant 0 : index
      %c0_22 = arith.constant 0 : index
      %39 = vector.load %arg5[%c0_21, %c0_22] : memref<1x1xf32, #tpu.memory_space<vmem>>, vector<1x1xf32>
      tpu.vector_store %arg5[%c0_21, %c0_22], %38 {strides = array<i32>} : memref<1x1xf32, #tpu.memory_space<vmem>>, vector<1x1xf32>,
    } else {
    }
    %22 = arith.cmpi eq, %arg0, %arg1 : i32
    %23 = arith.extui %22 : i1 to i32
    %c0_i32_12 = arith.constant 0 : i32
    %24 = arith.cmpi ne, %23, %c0_i32_12 : i32
    scf.if %24 {
      %25 = arith.mulf %5, %6 : vector<8x128xf32>
      %cst_13 = arith.constant dense<0.000000e+00> : vector<8xf32>
      %26 = vector.multi_reduction <add>, %25, %cst_13 [1] : vector<8x128xf32> to vector<8xf32>
      %27 = vector.shape_cast %26 : vector<8xf32> to vector<8x1xf32>
      %28 = arith.mulf %5, %5 : vector<8x128xf32>
      %cst_14 = arith.constant dense<0.000000e+00> : vector<8xf32>
      %29 = vector.multi_reduction <add>, %28, %cst_14 [1] : vector<8x128xf32> to vector<8xf32>
      %30 = vector.shape_cast %29 : vector<8xf32> to vector<8x1xf32>
      %31 = arith.addf %27, %30 : vector<8x1xf32>
      %cst_15 = arith.constant dense<0.000000e+00> : vector<1xf32>
      %32 = vector.multi_reduction <add>, %31, %cst_15 [0] : vector<8x1xf32> to vector<1xf32>
      %33 = vector.shape_cast %32 : vector<1xf32> to vector<1x1xf32>
      %34 = arith.mulf %27, %27 : vector<8x1xf32>
      %35 = arith.mulf %30, %30 : vector<8x1xf32>
      %36 = arith.addf %34, %35 : vector<8x1xf32>
      %cst_16 = arith.constant dense<0.000000e+00> : vector<1xf32>
      %37 = vector.multi_reduction <add>, %36, %cst_16 [0] : vector<8x1xf32> to vector<1xf32>
      %38 = vector.shape_cast %37 : vector<1xf32> to vector<1x1xf32>
      %c0_17 = arith.constant 0 : index
      %c0_18 = arith.constant 0 : index
      %39 = vector.load %arg5[%c0_17, %c0_18] : memref<1x1xf32, #tpu.memory_space<vmem>>, vector<1x1xf32>
      %cst_19 = arith.constant -2.500000e-01 : f32
      %40 = vector.broadcast %cst_19 : f32 to vector<1x1xf32>
      %41 = arith.mulf %40, %33 : vector<1x1xf32>
      %cst_20 = arith.constant 0.0178571437 : f32
      %42 = vector.broadcast %cst_20 : f32 to vector<1x1xf32>
      %43 = arith.mulf %42, %38 : vector<1x1xf32>
      %44 = arith.subf %41, %43 : vector<1x1xf32>
      %45 = arith.addf %39, %44 : vector<1x1xf32>
      %c0_21 = arith.constant 0 : index
      %c0_22 = arith.constant 0 : index
      %46 = vector.load %arg5[%c0_21, %c0_22] : memref<1x1xf32, #tpu.memory_space<vmem>>, vector<1x1xf32>
      tpu.vector_store %arg5[%c0_21, %c0_22], %45 {strides = array<i32>} : memref<1x1xf32, #tpu.memory_space<vmem>>, vector<1x1xf32>,
    } else {
    }
    return
  }
  func.func @transform_0(%arg0: i32, %arg1: i32) -> (i32, i32) {
    %c0_i32 = arith.constant 0 : i32
    %c0_i32_0 = arith.constant 0 : i32
    return %arg0, %c0_i32 : i32, i32
  }
  func.func @transform_1(%arg0: i32, %arg1: i32) -> (i32, i32) {
    %c0_i32 = arith.constant 0 : i32
    %c0_i32_0 = arith.constant 0 : i32
    return %arg1, %c0_i32 : i32, i32
  }
  func.func @transform_2(%arg0: i32, %arg1: i32) -> (i32, i32) {
    %c0_i32 = arith.constant 0 : i32
    %c0_i32_0 = arith.constant 0 : i32
    return %arg1, %c0_i32 : i32, i32
  }
  func.func @transform_3(%arg0: i32, %arg1: i32) -> (i32, i32) {
    %c0_i32 = arith.constant 0 : i32
    %c0_i32_0 = arith.constant 0 : i32
    %c0_i32_1 = arith.constant 0 : i32
    return %c0_i32, %c0_i32_0 : i32, i32
  }
}

module attributes {stable_mosaic.version = 11 : i64} {
  func.func @_mlp_kernel(%arg0: i32, %arg1: memref<8x16xf32, #tpu.memory_space<vmem>>, %arg2: memref<16x128xf32, #tpu.memory_space<vmem>>, %arg3: memref<4x128xf32, #tpu.memory_space<vmem>>, %arg4: memref<128x128xf32, #tpu.memory_space<vmem>>, %arg5: memref<128x128xf32, #tpu.memory_space<vmem>>, %arg6: memref<1x128xf32, #tpu.memory_space<vmem>>, %arg7: memref<8x128xf32, #tpu.memory_space<vmem>>) attributes {dimension_semantics = [#tpu.dimension_semantics<parallel>], iteration_bounds = array<i64: 1>, scalar_prefetch = 0 : i64, scratch_operands = 0 : i64, tpu.core_type = #tpu.core_type<tc>, window_params = [{transform_indices = @transform_0, window_bounds = array<i64: 8, 16>}, {pipeline_mode = #tpu.pipeline_mode<synchronous>, transform_indices = @transform_1, window_bounds = array<i64: 16, 128>}, {pipeline_mode = #tpu.pipeline_mode<synchronous>, transform_indices = @transform_2, window_bounds = array<i64: 4, 128>}, {pipeline_mode = #tpu.pipeline_mode<synchronous>, transform_indices = @transform_3, window_bounds = array<i64: 128, 128>}, {pipeline_mode = #tpu.pipeline_mode<synchronous>, transform_indices = @transform_4, window_bounds = array<i64: 128, 128>}, {pipeline_mode = #tpu.pipeline_mode<synchronous>, transform_indices = @transform_5, window_bounds = array<i64: 1, 128>}, {transform_indices = @transform_6, window_bounds = array<i64: 8, 128>}]} {
    %c0 = arith.constant 0 : index
    %c0_0 = arith.constant 0 : index
    %0 = vector.load %arg3[%c0, %c0_0] : memref<4x128xf32, #tpu.memory_space<vmem>>, vector<4x128xf32>
    %1 = vector.extract_strided_slice %0 {offsets = [0, 0], sizes = [1, 128], strides = [1, 1]} : vector<4x128xf32> to vector<1x128xf32>
    %2 = vector.extract_strided_slice %0 {offsets = [1, 0], sizes = [1, 128], strides = [1, 1]} : vector<4x128xf32> to vector<1x128xf32>
    %3 = vector.extract_strided_slice %0 {offsets = [2, 0], sizes = [1, 128], strides = [1, 1]} : vector<4x128xf32> to vector<1x128xf32>
    %4 = vector.extract_strided_slice %0 {offsets = [3, 0], sizes = [1, 128], strides = [1, 1]} : vector<4x128xf32> to vector<1x128xf32>
    %c0_1 = arith.constant 0 : index
    %c0_2 = arith.constant 0 : index
    %5 = vector.load %arg1[%c0_1, %c0_2] : memref<8x16xf32, #tpu.memory_space<vmem>>, vector<8x16xf32>
    %c0_3 = arith.constant 0 : index
    %c0_4 = arith.constant 0 : index
    %6 = vector.load %arg2[%c0_3, %c0_4] : memref<16x128xf32, #tpu.memory_space<vmem>>, vector<16x128xf32>
    %cst = arith.constant dense<0.000000e+00> : vector<8x128xf32>
    %7 = tpu.matmul %5, %6, %cst {dimension_numbers = #tpu.dot_dimension_numbers<[1], [0], [0], [1], [0, 0, 1, 1], [], []>} : vector<8x16xf32>, vector<16x128xf32>, vector<8x128xf32> -> vector<8x128xf32>
    %8 = vector.broadcast %1 : vector<1x128xf32> to vector<8x128xf32>
    %9 = arith.addf %7, %8 : vector<8x128xf32>
    %cst_5 = arith.constant dense<0.000000e+00> : vector<8xf32>
    %10 = vector.multi_reduction <add>, %9, %cst_5 [1] : vector<8x128xf32> to vector<8xf32>
    %11 = vector.shape_cast %10 : vector<8xf32> to vector<8x1xf32>
    %cst_6 = arith.constant 3.125000e-02 : f32
    %12 = vector.broadcast %cst_6 : f32 to vector<8x1xf32>
    %13 = arith.mulf %11, %12 : vector<8x1xf32>
    %14 = arith.mulf %9, %9 : vector<8x128xf32>
    %cst_7 = arith.constant dense<0.000000e+00> : vector<8xf32>
    %15 = vector.multi_reduction <add>, %14, %cst_7 [1] : vector<8x128xf32> to vector<8xf32>
    %16 = vector.shape_cast %15 : vector<8xf32> to vector<8x1xf32>
    %cst_8 = arith.constant 3.125000e-02 : f32
    %17 = vector.broadcast %cst_8 : f32 to vector<8x1xf32>
    %18 = arith.mulf %16, %17 : vector<8x1xf32>
    %19 = arith.mulf %13, %13 : vector<8x1xf32>
    %20 = arith.subf %18, %19 : vector<8x1xf32>
    %cst_9 = arith.constant 0.000000e+00 : f32
    %21 = vector.broadcast %cst_9 : f32 to vector<8x1xf32>
    %22 = arith.maximumf %20, %21 : vector<8x1xf32>
    %23 = vector.broadcast %13 : vector<8x1xf32> to vector<8x128xf32>
    %24 = arith.subf %9, %23 : vector<8x128xf32>
    %cst_10 = arith.constant 9.99999974E-6 : f32
    %25 = vector.broadcast %cst_10 : f32 to vector<8x1xf32>
    %26 = arith.addf %22, %25 : vector<8x1xf32>
    %27 = math.rsqrt %26 : vector<8x1xf32>
    %28 = vector.broadcast %27 : vector<8x1xf32> to vector<8x128xf32>
    %29 = arith.mulf %24, %28 : vector<8x128xf32>
    %30 = vector.broadcast %2 : vector<1x128xf32> to vector<8x128xf32>
    %31 = arith.mulf %29, %30 : vector<8x128xf32>
    %32 = vector.broadcast %3 : vector<1x128xf32> to vector<8x128xf32>
    %33 = arith.addf %31, %32 : vector<8x128xf32>
    %34 = math.tanh %33 : vector<8x128xf32>
    %c0_11 = arith.constant 0 : index
    %c0_12 = arith.constant 0 : index
    %35 = vector.load %arg4[%c0_11, %c0_12] : memref<128x128xf32, #tpu.memory_space<vmem>>, vector<128x128xf32>
    %cst_13 = arith.constant dense<0.000000e+00> : vector<8x128xf32>
    %36 = tpu.matmul %34, %35, %cst_13 {dimension_numbers = #tpu.dot_dimension_numbers<[1], [0], [0], [1], [0, 0, 1, 1], [], []>} : vector<8x128xf32>, vector<128x128xf32>, vector<8x128xf32> -> vector<8x128xf32>
    %37 = vector.broadcast %4 : vector<1x128xf32> to vector<8x128xf32>
    %38 = arith.addf %36, %37 : vector<8x128xf32>
    %cst_14 = arith.constant 0.000000e+00 : f32
    %39 = vector.broadcast %cst_14 : f32 to vector<8x128xf32>
    %40 = arith.maximumf %38, %39 : vector<8x128xf32>
    %c0_15 = arith.constant 0 : index
    %c0_16 = arith.constant 0 : index
    %41 = vector.load %arg5[%c0_15, %c0_16] : memref<128x128xf32, #tpu.memory_space<vmem>>, vector<128x128xf32>
    %cst_17 = arith.constant dense<0.000000e+00> : vector<8x128xf32>
    %42 = tpu.matmul %40, %41, %cst_17 {dimension_numbers = #tpu.dot_dimension_numbers<[1], [0], [0], [1], [0, 0, 1, 1], [], []>} : vector<8x128xf32>, vector<128x128xf32>, vector<8x128xf32> -> vector<8x128xf32>
    %c0_18 = arith.constant 0 : index
    %c0_19 = arith.constant 0 : index
    %43 = vector.load %arg6[%c0_18, %c0_19] : memref<1x128xf32, #tpu.memory_space<vmem>>, vector<1x128xf32>
    %44 = vector.broadcast %43 : vector<1x128xf32> to vector<8x128xf32>
    %45 = arith.addf %42, %44 : vector<8x128xf32>
    %c0_20 = arith.constant 0 : index
    %c0_21 = arith.constant 0 : index
    %46 = vector.load %arg7[%c0_20, %c0_21] : memref<8x128xf32, #tpu.memory_space<vmem>>, vector<8x128xf32>
    tpu.vector_store %arg7[%c0_20, %c0_21], %45 {strides = array<i32>} : memref<8x128xf32, #tpu.memory_space<vmem>>, vector<8x128xf32>,
    return
  }
  func.func @transform_0(%arg0: i32) -> (i32, i32) {
    %c0_i32 = arith.constant 0 : i32
    %c0_i32_0 = arith.constant 0 : i32
    return %arg0, %c0_i32 : i32, i32
  }
  func.func @transform_1(%arg0: i32) -> (i32, i32) {
    %c0_i32 = arith.constant 0 : i32
    %c0_i32_0 = arith.constant 0 : i32
    %c0_i32_1 = arith.constant 0 : i32
    return %c0_i32, %c0_i32_0 : i32, i32
  }
  func.func @transform_2(%arg0: i32) -> (i32, i32) {
    %c0_i32 = arith.constant 0 : i32
    %c0_i32_0 = arith.constant 0 : i32
    %c0_i32_1 = arith.constant 0 : i32
    return %c0_i32, %c0_i32_0 : i32, i32
  }
  func.func @transform_3(%arg0: i32) -> (i32, i32) {
    %c0_i32 = arith.constant 0 : i32
    %c0_i32_0 = arith.constant 0 : i32
    %c0_i32_1 = arith.constant 0 : i32
    return %c0_i32, %c0_i32_0 : i32, i32
  }
  func.func @transform_4(%arg0: i32) -> (i32, i32) {
    %c0_i32 = arith.constant 0 : i32
    %c0_i32_0 = arith.constant 0 : i32
    %c0_i32_1 = arith.constant 0 : i32
    return %c0_i32, %c0_i32_0 : i32, i32
  }
  func.func @transform_5(%arg0: i32) -> (i32, i32) {
    %c0_i32 = arith.constant 0 : i32
    %c0_i32_0 = arith.constant 0 : i32
    %c0_i32_1 = arith.constant 0 : i32
    return %c0_i32, %c0_i32_0 : i32, i32
  }
  func.func @transform_6(%arg0: i32) -> (i32, i32) {
    %c0_i32 = arith.constant 0 : i32
    %c0_i32_0 = arith.constant 0 : i32
    return %arg0, %c0_i32 : i32, i32
  }
}

module attributes {stable_mosaic.version = 11 : i64} {
  func.func @_mlp_kernel(%arg0: i32, %arg1: memref<8x16xf32, #tpu.memory_space<vmem>>, %arg2: memref<16x128xf32, #tpu.memory_space<vmem>>, %arg3: memref<8x8xf32, #tpu.memory_space<vmem>>, %arg4: memref<8x128xf32, #tpu.memory_space<vmem>>, %arg5: memref<4x128xf32, #tpu.memory_space<vmem>>, %arg6: memref<128x128xf32, #tpu.memory_space<vmem>>, %arg7: memref<128x128xf32, #tpu.memory_space<vmem>>, %arg8: memref<1x128xf32, #tpu.memory_space<vmem>>, %arg9: memref<8x128xf32, #tpu.memory_space<vmem>>) attributes {dimension_semantics = [#tpu.dimension_semantics<parallel>], iteration_bounds = array<i64: 1>, scalar_prefetch = 0 : i64, scratch_operands = 0 : i64, tpu.core_type = #tpu.core_type<tc>, window_params = [{transform_indices = @transform_0, window_bounds = array<i64: 8, 16>}, {pipeline_mode = #tpu.pipeline_mode<synchronous>, transform_indices = @transform_1, window_bounds = array<i64: 16, 128>}, {transform_indices = @transform_2, window_bounds = array<i64: 8, 8>}, {pipeline_mode = #tpu.pipeline_mode<synchronous>, transform_indices = @transform_3, window_bounds = array<i64: 8, 128>}, {pipeline_mode = #tpu.pipeline_mode<synchronous>, transform_indices = @transform_4, window_bounds = array<i64: 4, 128>}, {pipeline_mode = #tpu.pipeline_mode<synchronous>, transform_indices = @transform_5, window_bounds = array<i64: 128, 128>}, {pipeline_mode = #tpu.pipeline_mode<synchronous>, transform_indices = @transform_6, window_bounds = array<i64: 128, 128>}, {pipeline_mode = #tpu.pipeline_mode<synchronous>, transform_indices = @transform_7, window_bounds = array<i64: 1, 128>}, {transform_indices = @transform_8, window_bounds = array<i64: 8, 128>}]} {
    %c0 = arith.constant 0 : index
    %c0_0 = arith.constant 0 : index
    %0 = vector.load %arg5[%c0, %c0_0] : memref<4x128xf32, #tpu.memory_space<vmem>>, vector<4x128xf32>
    %1 = vector.extract_strided_slice %0 {offsets = [0, 0], sizes = [1, 128], strides = [1, 1]} : vector<4x128xf32> to vector<1x128xf32>
    %2 = vector.extract_strided_slice %0 {offsets = [1, 0], sizes = [1, 128], strides = [1, 1]} : vector<4x128xf32> to vector<1x128xf32>
    %3 = vector.extract_strided_slice %0 {offsets = [2, 0], sizes = [1, 128], strides = [1, 1]} : vector<4x128xf32> to vector<1x128xf32>
    %4 = vector.extract_strided_slice %0 {offsets = [3, 0], sizes = [1, 128], strides = [1, 1]} : vector<4x128xf32> to vector<1x128xf32>
    %c0_1 = arith.constant 0 : index
    %c0_2 = arith.constant 0 : index
    %5 = vector.load %arg1[%c0_1, %c0_2] : memref<8x16xf32, #tpu.memory_space<vmem>>, vector<8x16xf32>
    %c0_3 = arith.constant 0 : index
    %c0_4 = arith.constant 0 : index
    %6 = vector.load %arg2[%c0_3, %c0_4] : memref<16x128xf32, #tpu.memory_space<vmem>>, vector<16x128xf32>
    %cst = arith.constant dense<0.000000e+00> : vector<8x128xf32>
    %7 = tpu.matmul %5, %6, %cst {dimension_numbers = #tpu.dot_dimension_numbers<[1], [0], [0], [1], [0, 0, 1, 1], [], []>} : vector<8x16xf32>, vector<16x128xf32>, vector<8x128xf32> -> vector<8x128xf32>
    %c0_5 = arith.constant 0 : index
    %c0_6 = arith.constant 0 : index
    %8 = vector.load %arg3[%c0_5, %c0_6] : memref<8x8xf32, #tpu.memory_space<vmem>>, vector<8x8xf32>
    %c0_7 = arith.constant 0 : index
    %c0_8 = arith.constant 0 : index
    %9 = vector.load %arg4[%c0_7, %c0_8] : memref<8x128xf32, #tpu.memory_space<vmem>>, vector<8x128xf32>
    %cst_9 = arith.constant dense<0.000000e+00> : vector<8x128xf32>
    %10 = tpu.matmul %8, %9, %cst_9 {dimension_numbers = #tpu.dot_dimension_numbers<[1], [0], [0], [1], [0, 0, 1, 1], [], []>} : vector<8x8xf32>, vector<8x128xf32>, vector<8x128xf32> -> vector<8x128xf32>
    %11 = arith.addf %7, %10 : vector<8x128xf32>
    %12 = vector.broadcast %1 : vector<1x128xf32> to vector<8x128xf32>
    %13 = arith.addf %11, %12 : vector<8x128xf32>
    %cst_10 = arith.constant dense<0.000000e+00> : vector<8xf32>
    %14 = vector.multi_reduction <add>, %13, %cst_10 [1] : vector<8x128xf32> to vector<8xf32>
    %15 = vector.shape_cast %14 : vector<8xf32> to vector<8x1xf32>
    %cst_11 = arith.constant 3.125000e-02 : f32
    %16 = vector.broadcast %cst_11 : f32 to vector<8x1xf32>
    %17 = arith.mulf %15, %16 : vector<8x1xf32>
    %18 = arith.mulf %13, %13 : vector<8x128xf32>
    %cst_12 = arith.constant dense<0.000000e+00> : vector<8xf32>
    %19 = vector.multi_reduction <add>, %18, %cst_12 [1] : vector<8x128xf32> to vector<8xf32>
    %20 = vector.shape_cast %19 : vector<8xf32> to vector<8x1xf32>
    %cst_13 = arith.constant 3.125000e-02 : f32
    %21 = vector.broadcast %cst_13 : f32 to vector<8x1xf32>
    %22 = arith.mulf %20, %21 : vector<8x1xf32>
    %23 = arith.mulf %17, %17 : vector<8x1xf32>
    %24 = arith.subf %22, %23 : vector<8x1xf32>
    %cst_14 = arith.constant 0.000000e+00 : f32
    %25 = vector.broadcast %cst_14 : f32 to vector<8x1xf32>
    %26 = arith.maximumf %24, %25 : vector<8x1xf32>
    %27 = vector.broadcast %17 : vector<8x1xf32> to vector<8x128xf32>
    %28 = arith.subf %13, %27 : vector<8x128xf32>
    %cst_15 = arith.constant 9.99999974E-6 : f32
    %29 = vector.broadcast %cst_15 : f32 to vector<8x1xf32>
    %30 = arith.addf %26, %29 : vector<8x1xf32>
    %31 = math.rsqrt %30 : vector<8x1xf32>
    %32 = vector.broadcast %31 : vector<8x1xf32> to vector<8x128xf32>
    %33 = arith.mulf %28, %32 : vector<8x128xf32>
    %34 = vector.broadcast %2 : vector<1x128xf32> to vector<8x128xf32>
    %35 = arith.mulf %33, %34 : vector<8x128xf32>
    %36 = vector.broadcast %3 : vector<1x128xf32> to vector<8x128xf32>
    %37 = arith.addf %35, %36 : vector<8x128xf32>
    %38 = math.tanh %37 : vector<8x128xf32>
    %c0_16 = arith.constant 0 : index
    %c0_17 = arith.constant 0 : index
    %39 = vector.load %arg6[%c0_16, %c0_17] : memref<128x128xf32, #tpu.memory_space<vmem>>, vector<128x128xf32>
    %cst_18 = arith.constant dense<0.000000e+00> : vector<8x128xf32>
    %40 = tpu.matmul %38, %39, %cst_18 {dimension_numbers = #tpu.dot_dimension_numbers<[1], [0], [0], [1], [0, 0, 1, 1], [], []>} : vector<8x128xf32>, vector<128x128xf32>, vector<8x128xf32> -> vector<8x128xf32>
    %41 = vector.broadcast %4 : vector<1x128xf32> to vector<8x128xf32>
    %42 = arith.addf %40, %41 : vector<8x128xf32>
    %cst_19 = arith.constant 0.000000e+00 : f32
    %43 = vector.broadcast %cst_19 : f32 to vector<8x128xf32>
    %44 = arith.maximumf %42, %43 : vector<8x128xf32>
    %c0_20 = arith.constant 0 : index
    %c0_21 = arith.constant 0 : index
    %45 = vector.load %arg7[%c0_20, %c0_21] : memref<128x128xf32, #tpu.memory_space<vmem>>, vector<128x128xf32>
    %cst_22 = arith.constant dense<0.000000e+00> : vector<8x128xf32>
    %46 = tpu.matmul %44, %45, %cst_22 {dimension_numbers = #tpu.dot_dimension_numbers<[1], [0], [0], [1], [0, 0, 1, 1], [], []>} : vector<8x128xf32>, vector<128x128xf32>, vector<8x128xf32> -> vector<8x128xf32>
    %c0_23 = arith.constant 0 : index
    %c0_24 = arith.constant 0 : index
    %47 = vector.load %arg8[%c0_23, %c0_24] : memref<1x128xf32, #tpu.memory_space<vmem>>, vector<1x128xf32>
    %48 = vector.broadcast %47 : vector<1x128xf32> to vector<8x128xf32>
    %49 = arith.addf %46, %48 : vector<8x128xf32>
    %50 = arith.mulf %49, %49 : vector<8x128xf32>
    %cst_25 = arith.constant dense<0.000000e+00> : vector<8xf32>
    %51 = vector.multi_reduction <add>, %50, %cst_25 [1] : vector<8x128xf32> to vector<8xf32>
    %52 = vector.shape_cast %51 : vector<8xf32> to vector<8x1xf32>
    %cst_26 = arith.constant 1.000000e-24 : f32
    %53 = vector.broadcast %cst_26 : f32 to vector<8x1xf32>
    %54 = arith.maximumf %52, %53 : vector<8x1xf32>
    %55 = math.rsqrt %54 : vector<8x1xf32>
    %56 = vector.broadcast %55 : vector<8x1xf32> to vector<8x128xf32>
    %57 = arith.mulf %49, %56 : vector<8x128xf32>
    %c0_27 = arith.constant 0 : index
    %c0_28 = arith.constant 0 : index
    %58 = vector.load %arg9[%c0_27, %c0_28] : memref<8x128xf32, #tpu.memory_space<vmem>>, vector<8x128xf32>
    tpu.vector_store %arg9[%c0_27, %c0_28], %57 {strides = array<i32>} : memref<8x128xf32, #tpu.memory_space<vmem>>, vector<8x128xf32>,
    return
  }
  func.func @transform_0(%arg0: i32) -> (i32, i32) {
    %c0_i32 = arith.constant 0 : i32
    %c0_i32_0 = arith.constant 0 : i32
    return %arg0, %c0_i32 : i32, i32
  }
  func.func @transform_1(%arg0: i32) -> (i32, i32) {
    %c0_i32 = arith.constant 0 : i32
    %c0_i32_0 = arith.constant 0 : i32
    %c0_i32_1 = arith.constant 0 : i32
    return %c0_i32, %c0_i32_0 : i32, i32
  }
  func.func @transform_2(%arg0: i32) -> (i32, i32) {
    %c0_i32 = arith.constant 0 : i32
    %c0_i32_0 = arith.constant 0 : i32
    return %arg0, %c0_i32 : i32, i32
  }
  func.func @transform_3(%arg0: i32) -> (i32, i32) {
    %c0_i32 = arith.constant 0 : i32
    %c0_i32_0 = arith.constant 0 : i32
    %c0_i32_1 = arith.constant 0 : i32
    return %c0_i32, %c0_i32_0 : i32, i32
  }
  func.func @transform_4(%arg0: i32) -> (i32, i32) {
    %c0_i32 = arith.constant 0 : i32
    %c0_i32_0 = arith.constant 0 : i32
    %c0_i32_1 = arith.constant 0 : i32
    return %c0_i32, %c0_i32_0 : i32, i32
  }
  func.func @transform_5(%arg0: i32) -> (i32, i32) {
    %c0_i32 = arith.constant 0 : i32
    %c0_i32_0 = arith.constant 0 : i32
    %c0_i32_1 = arith.constant 0 : i32
    return %c0_i32, %c0_i32_0 : i32, i32
  }
  func.func @transform_6(%arg0: i32) -> (i32, i32) {
    %c0_i32 = arith.constant 0 : i32
    %c0_i32_0 = arith.constant 0 : i32
    %c0_i32_1 = arith.constant 0 : i32
    return %c0_i32, %c0_i32_0 : i32, i32
  }
  func.func @transform_7(%arg0: i32) -> (i32, i32) {
    %c0_i32 = arith.constant 0 : i32
    %c0_i32_0 = arith.constant 0 : i32
    %c0_i32_1 = arith.constant 0 : i32
    return %c0_i32, %c0_i32_0 : i32, i32
  }
  func.func @transform_8(%arg0: i32) -> (i32, i32) {
    %c0_i32 = arith.constant 0 : i32
    %c0_i32_0 = arith.constant 0 : i32
    return %arg0, %c0_i32 : i32, i32
  }
}

</mosaic_0001>

<llo_original>
// kernel: _lambda_.4
$region0: #{_lambda_.4}
  #allocation0 [shape = 'u32[]', space=smem, size = 0x4, offset = 0x4, fixed_abs, tag = 'smem constant byte address 0x4 - core index']
  #allocation1 [shape = 'u32[144,128]{1,0:T(1,128)}', space=vmem, size = 0x12000, scoped, tag = 'internal scratch']
  %s0 = inlined_call_operand.vmem [shape: f32[8,16], index: 0, kind: input, shape index: {}]
  %s1 = inlined_call_operand.vmem [shape: f32[16,128], index: 1, kind: input, shape index: {}]
  %s2 = inlined_call_operand.vmem [shape: f32[4,128], index: 2, kind: input, shape index: {}]
  %s3 = inlined_call_operand.vmem [shape: f32[128,128], index: 3, kind: input, shape index: {}]
  %s4 = inlined_call_operand.vmem [shape: f32[128,128], index: 4, kind: input, shape index: {}]
  %s5 = inlined_call_operand.vmem [shape: f32[1,128], index: 5, kind: input, shape index: {}]
  %s6 = inlined_call_operand.vmem [shape: f32[8,128], index: 6, kind: output, shape index: {}]
  %s7 = sld [smem:[#allocation0]]
  $region34: #{_lambda_.4} parent=0
    _
  %s9 = ssub.s32 1, %s7
  %s10 = scalar_select 0, %s9, %s7
  // Predicated region
  $region2: #{_lambda_.4} parent=0 // pred_check
    _
  $region3: #{_lambda_.4} parent=0 // pred_check_branch
    %12 = sbr.rel (0) target = $region5
  $region4: #{_lambda_.4} parent=0 // pred_region
    _
  $region5: #{_lambda_.4} parent=0 // pred_fallthru
    _
  // Predicated region
  $region6: #{_lambda_.4} parent=0 // pred_check
    _
  $region7: #{_lambda_.4} parent=0 // pred_check_branch
    %14 = sbr.rel (0) target = $region9
  $region8: #{_lambda_.4} parent=0 // pred_region
    _
  $region9: #{_lambda_.4} parent=0 // pred_fallthru
    _
  // Predicated region
  $region10: #{_lambda_.4} parent=0 // pred_check
    _
  $region11: #{_lambda_.4} parent=0 // pred_check_branch
    %16 = sbr.rel (0) target = $region13
  $region12: #{_lambda_.4} parent=0 // pred_region
    _
  $region13: #{_lambda_.4} parent=0 // pred_fallthru
    _
  // Predicated region
  $region14: #{_lambda_.4} parent=0 // pred_check
    _
  $region15: #{_lambda_.4} parent=0 // pred_check_branch
    %18 = sbr.rel (0) target = $region17
  $region16: #{_lambda_.4} parent=0 // pred_region
    _
  $region17: #{_lambda_.4} parent=0 // pred_fallthru
    _
  // Predicated region
  $region18: #{_lambda_.4} parent=0 // pred_check
    _
  $region19: #{_lambda_.4} parent=0 // pred_check_branch
    %20 = sbr.rel (0) target = $region21
  $region20: #{_lambda_.4} parent=0 // pred_region
    _
  $region21: #{_lambda_.4} parent=0 // pred_fallthru
    _
  // Predicated region
  $region22: #{_lambda_.4} parent=0 // pred_check
    _
  $region23: #{_lambda_.4} parent=0 // pred_check_branch
    %22 = sbr.rel (0) target = $region25
  $region24: #{_lambda_.4} parent=0 // pred_region
    _
  $region25: #{_lambda_.4} parent=0 // pred_fallthru
    _
  %v23 = vld [vmem:[%s2] sm:$0xf]
  %v24 = vld [vmem:[%s0] sm:$0xff]
  %v25 = vld [vmem:[%s1] sm:$0xff]
  %v26 = vld [vmem:[%s1 + $0x8] sm:$0xff]
  %v27 = vlaneseq
  %v28 = vshrl.u32 %v27, 7
  %v29 = vsub.s32 0, %v28
  %v30 = vrot.slane %v23, %v29
  %vm31 = vcmask 130048
  %v33 = vsel %vm31, %v24, 0
  %35 = vmatprep.subr.mxu0 0.0
  %36 = vmatpush1.msra.mxu0 0.0
  %37 = vmatprep.subr.mxu0 0.0
  %38 = vmatpush1.msra.mxu0 0.0
  %39 = vmatprep.subr.mxu0 0.0
  %40 = vmatpush1.msra.mxu0 0.0
  %41 = vmatprep.subr.mxu0 0.0
  %42 = vmatpush1.msra.mxu0 0.0
  %43 = vmatprep.subr.mxu0 0.0
  %44 = vmatpush1.msra.mxu0 0.0
  %45 = vmatprep.subr.mxu0 0.0
  %46 = vmatpush1.msra.mxu0 0.0
  %47 = vmatprep.subr.mxu0 0.0
  %48 = vmatpush1.msra.mxu0 0.0
  %49 = vmatprep.subr.mxu0 0.0
  %50 = vmatpush1.msra.mxu0 0.0
  %51 = vmatprep.subr.mxu0 0.0
  %52 = vmatpush1.msra.mxu0 0.0
  %53 = vmatprep.subr.mxu0 0.0
  %54 = vmatpush1.msra.mxu0 0.0
  %55 = vmatprep.subr.mxu0 0.0
  %56 = vmatpush1.msra.mxu0 0.0
  %57 = vmatprep.subr.mxu0 0.0
  %58 = vmatpush1.msra.mxu0 0.0
  %59 = vmatprep.subr.mxu0 0.0
  %60 = vmatpush1.msra.mxu0 0.0
  %61 = vmatprep.subr.mxu0 0.0
  %62 = vmatpush1.msra.mxu0 0.0
  %63 = vmatprep.subr.mxu0 0.0
  %64 = vmatpush1.msra.mxu0 %v26
  %65 = vmatprep.subr.mxu0 0.0
  %66 = vmatpush1.msra.mxu0 %v25
  %67 = vmatprep.subr.mxu0 0.0
  %68 = vmatpush2.msra.mxu0 0.0
  %69 = vmatprep.subr.mxu0 0.0
  %70 = vmatpush2.msra.mxu0 0.0
  %71 = vmatprep.subr.mxu0 0.0
  %72 = vmatpush2.msra.mxu0 0.0
  %73 = vmatprep.subr.mxu0 0.0
  %74 = vmatpush2.msra.mxu0 0.0
  %75 = vmatprep.subr.mxu0 0.0
  %76 = vmatpush2.msra.mxu0 0.0
  %77 = vmatprep.subr.mxu0 0.0
  %78 = vmatpush2.msra.mxu0 0.0
  %79 = vmatprep.subr.mxu0 0.0
  %80 = vmatpush2.msra.mxu0 0.0
  %81 = vmatprep.subr.mxu0 0.0
  %82 = vmatpush2.msra.mxu0 0.0
  %83 = vmatprep.subr.mxu0 0.0
  %84 = vmatpush2.msra.mxu0 0.0
  %85 = vmatprep.subr.mxu0 0.0
  %86 = vmatpush2.msra.mxu0 0.0
  %87 = vmatprep.subr.mxu0 0.0
  %88 = vmatpush2.msra.mxu0 0.0
  %89 = vmatprep.subr.mxu0 0.0
  %90 = vmatpush2.msra.mxu0 0.0
  %91 = vmatprep.subr.mxu0 0.0
  %92 = vmatpush2.msra.mxu0 0.0
  %93 = vmatprep.subr.mxu0 0.0
  %94 = vmatpush2.msra.mxu0 0.0
  %95 = vmatprep.subr.mxu0 0.0
  %96 = vmatpush2.msra.mxu0 0.0
  %97 = vmatprep.subr.mxu0 0.0
  %98 = vmatpush2.msra.mxu0 0.0
  %99 = vmatprep.mubr.f32.mxu0 0.0
  %100 = vmatmul.mubr.f32.gmra.mxu0 %v33
  %v101 = vpop.f32.mrf.mxu0
  %v102 = vadd.f32 %v30, %v101
  %v103 = vpop.f32.mrf.mxu0
  %104 = vdwg.mxu0
  %105 = vadd.xlane.f32.xlu0 %v102
  %v106 = vpop.xlane.xlu0 %105
  %v107 = vmul.f32 %v106, 0.03125
  %v108 = vmul.f32 %v102, %v102
  %109 = vadd.xlane.f32.xlu0 %v108
  %v110 = vpop.xlane.xlu0 %109
  %v111 = vmul.f32 %v110, 0.03125
  %v112 = vmul.f32 %v107, %v107
  %v113 = vsub.f32 %v111, %v112
  %v114 = vmax.f32 %v113, 0.0
  %v115 = vsub.f32 %v102, %v107
  %v116 = vadd.f32 %v114, 1e-05
  %v117 = vrsqrt.pop %v116
  %v118 = vmul.f32 %v115, %v117
  %v119 = vlaneseq
  %v120 = vshrl.u32 %v119, 7
  %v121 = vsub.s32 1, %v120
  %v122 = vrot.slane %v23, %v121
  %v123 = vmul.f32 %v118, %v122
  %v124 = vlaneseq
  %v125 = vshrl.u32 %v124, 7
  %v126 = vsub.s32 2, %v125
  %v127 = vrot.slane %v23, %v126
  %v128 = vadd.f32 %v123, %v127
  %v129 = vtanh.pop %v128
  %v130 = vld [vmem:[%s3] sm:$0xff]
  %v131 = vld [vmem:[%s3 + $0x8] sm:$0xff]
  %v132 = vld [vmem:[%s3 + $0x10] sm:$0xff]
  %v133 = vld [vmem:[%s3 + $0x18] sm:$0xff]
  %v134 = vld [vmem:[%s3 + $0x20] sm:$0xff]
  %v135 = vld [vmem:[%s3 + $0x28] sm:$0xff]
  %v136 = vld [vmem:[%s3 + $0x30] sm:$0xff]
  %v137 = vld [vmem:[%s3 + $0x38] sm:$0xff]
  %v138 = vld [vmem:[%s3 + $0x40] sm:$0xff]
  %v139 = vld [vmem:[%s3 + $0x48] sm:$0xff]
  %v140 = vld [vmem:[%s3 + $0x50] sm:$0xff]
  %v141 = vld [vmem:[%s3 + $0x58] sm:$0xff]
  %v142 = vld [vmem:[%s3 + $0x60] sm:$0xff]
  %v143 = vld [vmem:[%s3 + $0x68] sm:$0xff]
  %v144 = vld [vmem:[%s3 + $0x70] sm:$0xff]
  %v145 = vld [vmem:[%s3 + $0x78] sm:$0xff]
  %v146 = vlaneseq
  %v147 = vshrl.u32 %v146, 7
  %v148 = vsub.s32 3, %v147
  %v149 = vrot.slane %v23, %v148
  %150 = vmatprep.subr.mxu0 0.0
  %151 = vmatpush1.msra.mxu0 %v145
  %152 = vmatprep.subr.mxu0 0.0
  %153 = vmatpush1.msra.mxu0 %v144
  %154 = vmatprep.subr.mxu0 0.0
  %155 = vmatpush1.msra.mxu0 %v143
  %156 = vmatprep.subr.mxu0 0.0
  %157 = vmatpush1.msra.mxu0 %v142
  %158 = vmatprep.subr.mxu0 0.0
  %159 = vmatpush1.msra.mxu0 %v141
  %160 = vmatprep.subr.mxu0 0.0
  %161 = vmatpush1.msra.mxu0 %v140
  %162 = vmatprep.subr.mxu0 0.0
  %163 = vmatpush1.msra.mxu0 %v139
  %164 = vmatprep.subr.mxu0 0.0
  %165 = vmatpush1.msra.mxu0 %v138
  %166 = vmatprep.subr.mxu0 0.0
  %167 = vmatpush1.msra.mxu0 %v137
  %168 = vmatprep.subr.mxu0 0.0
  %169 = vmatpush1.msra.mxu0 %v136
  %170 = vmatprep.subr.mxu0 0.0
  %171 = vmatpush1.msra.mxu0 %v135
  %172 = vmatprep.subr.mxu0 0.0
  %173 = vmatpush1.msra.mxu0 %v134
  %174 = vmatprep.subr.mxu0 0.0
  %175 = vmatpush1.msra.mxu0 %v133
  %176 = vmatprep.subr.mxu0 0.0
  %177 = vmatpush1.msra.mxu0 %v132
  %178 = vmatprep.subr.mxu0 0.0
  %179 = vmatpush1.msra.mxu0 %v131
  %180 = vmatprep.subr.mxu0 0.0
  %181 = vmatpush1.msra.mxu0 %v130
  %182 = vmatprep.subr.mxu0 0.0
  %183 = vmatpush2.msra.mxu0 0.0
  %184 = vmatprep.subr.mxu0 0.0
  %185 = vmatpush2.msra.mxu0 0.0
  %186 = vmatprep.subr.mxu0 0.0
  %187 = vmatpush2.msra.mxu0 0.0
  %188 = vmatprep.subr.mxu0 0.0
  %189 = vmatpush2.msra.mxu0 0.0
  %190 = vmatprep.subr.mxu0 0.0
  %191 = vmatpush2.msra.mxu0 0.0
  %192 = vmatprep.subr.mxu0 0.0
  %193 = vmatpush2.msra.mxu0 0.0
  %194 = vmatprep.subr.mxu0 0.0
  %195 = vmatpush2.msra.mxu0 0.0
  %196 = vmatprep.subr.mxu0 0.0
  %197 = vmatpush2.msra.mxu0 0.0
  %198 = vmatprep.subr.mxu0 0.0
  %199 = vmatpush2.msra.mxu0 0.0
  %200 = vmatprep.subr.mxu0 0.0
  %201 = vmatpush2.msra.mxu0 0.0
  %202 = vmatprep.subr.mxu0 0.0
  %203 = vmatpush2.msra.mxu0 0.0
  %204 = vmatprep.subr.mxu0 0.0
  %205 = vmatpush2.msra.mxu0 0.0
  %206 = vmatprep.subr.mxu0 0.0
  %207 = vmatpush2.msra.mxu0 0.0
  %208 = vmatprep.subr.mxu0 0.0
  %209 = vmatpush2.msra.mxu0 0.0
  %210 = vmatprep.subr.mxu0 0.0
  %211 = vmatpush2.msra.mxu0 0.0
  %212 = vmatprep.subr.mxu0 0.0
  %213 = vmatpush2.msra.mxu0 0.0
  %214 = vmatprep.mubr.f32.mxu0 0.0
  %215 = vmatmul.mubr.f32.gmra.mxu0 %v129
  %v216 = vpop.f32.mrf.mxu0
  %v217 = vadd.f32 %v149, %v216
  %v218 = vpop.f32.mrf.mxu0
  %219 = vdwg.mxu0
  %v220 = vmax.f32 %v217, 0.0
  %v221 = vld [vmem:[%s4] sm:$0xff]
  %v222 = vld [vmem:[%s4 + $0x8] sm:$0xff]
  %v223 = vld [vmem:[%s4 + $0x10] sm:$0xff]
  %v224 = vld [vmem:[%s4 + $0x18] sm:$0xff]
  %v225 = vld [vmem:[%s4 + $0x20] sm:$0xff]
  %v226 = vld [vmem:[%s4 + $0x28] sm:$0xff]
  %v227 = vld [vmem:[%s4 + $0x30] sm:$0xff]
  %v228 = vld [vmem:[%s4 + $0x38] sm:$0xff]
  %v229 = vld [vmem:[%s4 + $0x40] sm:$0xff]
  %v230 = vld [vmem:[%s4 + $0x48] sm:$0xff]
  %v231 = vld [vmem:[%s4 + $0x50] sm:$0xff]
  %v232 = vld [vmem:[%s4 + $0x58] sm:$0xff]
  %v233 = vld [vmem:[%s4 + $0x60] sm:$0xff]
  %v234 = vld [vmem:[%s4 + $0x68] sm:$0xff]
  %v235 = vld [vmem:[%s4 + $0x70] sm:$0xff]
  %v236 = vld [vmem:[%s4 + $0x78] sm:$0xff]
  %v237 = vld [vmem:[%s5] sm:$0x1]
  %v239 = vlaneseq
  %v240 = vshrl.u32 %v239, 7
  %v241 = vsub.s32 0, %v240
  %v242 = vrot.slane %v237, %v241
  %244 = vmatprep.subr.mxu0 0.0
  %245 = vmatpush1.msra.mxu0 %v236
  %246 = vmatprep.subr.mxu0 0.0
  %247 = vmatpush1.msra.mxu0 %v235
  %248 = vmatprep.subr.mxu0 0.0
  %249 = vmatpush1.msra.mxu0 %v234
  %250 = vmatprep.subr.mxu0 0.0
  %251 = vmatpush1.msra.mxu0 %v233
  %252 = vmatprep.subr.mxu0 0.0
  %253 = vmatpush1.msra.mxu0 %v232
  %254 = vmatprep.subr.mxu0 0.0
  %255 = vmatpush1.msra.mxu0 %v231
  %256 = vmatprep.subr.mxu0 0.0
  %257 = vmatpush1.msra.mxu0 %v230
  %258 = vmatprep.subr.mxu0 0.0
  %259 = vmatpush1.msra.mxu0 %v229
  %260 = vmatprep.subr.mxu0 0.0
  %261 = vmatpush1.msra.mxu0 %v228
  %262 = vmatprep.subr.mxu0 0.0
  %263 = vmatpush1.msra.mxu0 %v227
  %264 = vmatprep.subr.mxu0 0.0
  %265 = vmatpush1.msra.mxu0 %v226
  %266 = vmatprep.subr.mxu0 0.0
  %267 = vmatpush1.msra.mxu0 %v225
  %268 = vmatprep.subr.mxu0 0.0
  %269 = vmatpush1.msra.mxu0 %v224
  %270 = vmatprep.subr.mxu0 0.0
  %271 = vmatpush1.msra.mxu0 %v223
  %272 = vmatprep.subr.mxu0 0.0
  %273 = vmatpush1.msra.mxu0 %v222
  %274 = vmatprep.subr.mxu0 0.0
  %275 = vmatpush1.msra.mxu0 %v221
  %276 = vmatprep.subr.mxu0 0.0
  %277 = vmatpush2.msra.mxu0 0.0
  %278 = vmatprep.subr.mxu0 0.0
  %279 = vmatpush2.msra.mxu0 0.0
  %280 = vmatprep.subr.mxu0 0.0
  %281 = vmatpush2.msra.mxu0 0.0
  %282 = vmatprep.subr.mxu0 0.0
  %283 = vmatpush2.msra.mxu0 0.0
  %284 = vmatprep.subr.mxu0 0.0
  %285 = vmatpush2.msra.mxu0 0.0
  %286 = vmatprep.subr.mxu0 0.0
  %287 = vmatpush2.msra.mxu0 0.0
  %288 = vmatprep.subr.mxu0 0.0
  %289 = vmatpush2.msra.mxu0 0.0
  %290 = vmatprep.subr.mxu0 0.0
  %291 = vmatpush2.msra.mxu0 0.0
  %292 = vmatprep.subr.mxu0 0.0
  %293 = vmatpush2.msra.mxu0 0.0
  %294 = vmatprep.subr.mxu0 0.0
  %295 = vmatpush2.msra.mxu0 0.0
  %296 = vmatprep.subr.mxu0 0.0
  %297 = vmatpush2.msra.mxu0 0.0
  %298 = vmatprep.subr.mxu0 0.0
  %299 = vmatpush2.msra.mxu0 0.0
  %300 = vmatprep.subr.mxu0 0.0
  %301 = vmatpush2.msra.mxu0 0.0
  %302 = vmatprep.subr.mxu0 0.0
  %303 = vmatpush2.msra.mxu0 0.0
  %304 = vmatprep.subr.mxu0 0.0
  %305 = vmatpush2.msra.mxu0 0.0
  %306 = vmatprep.subr.mxu0 0.0
  %307 = vmatpush2.msra.mxu0 0.0
  %308 = vmatprep.mubr.f32.mxu0 0.0
  %309 = vmatmul.mubr.f32.gmra.mxu0 %v220
  %v310 = vpop.f32.mrf.mxu0
  %v311 = vadd.f32 %v242, %v310
  %v312 = vpop.f32.mrf.mxu0
  %313 = vdwg.mxu0
  %314 = vst [vmem:[%s6] sm:$0xff] %v311
  // Predicated region
  $region26: #{_lambda_.4} parent=0 // pred_check
    _
  $region27: #{_lambda_.4} parent=0 // pred_check_branch
    %316 = sbr.rel (0) target = $region29
  $region28: #{_lambda_.4} parent=0 // pred_region
    _
  $region29: #{_lambda_.4} parent=0 // pred_fallthru
    _
  // Predicated region
  $region30: #{_lambda_.4} parent=0 // pred_check
    _
  $region31: #{_lambda_.4} parent=0 // pred_check_branch
    %318 = sbr.rel (0) target = $region33
  $region32: #{_lambda_.4} parent=0 // pred_region
    _
  $region33: #{_lambda_.4} parent=0 // pred_fallthru
    _

// kernel: _lambda_.5
$region0: #{_lambda_.5}
  #allocation0 [shape = 'u32[]', space=smem, size = 0x4, offset = 0x4, fixed_abs, tag = 'smem constant byte address 0x4 - core index']
  #allocation1 [shape = 'u32[144,128]{1,0:T(1,128)}', space=vmem, size = 0x12000, scoped, tag = 'internal scratch']
  %s0 = inlined_call_operand.vmem [shape: f32[8,128], index: 0, kind: input, shape index: {}, may-alias: {0,1}]
  %s1 = inlined_call_operand.vmem [shape: f32[8,128], index: 1, kind: input, shape index: {}, may-alias: {0,1}]
  %s2 = inlined_call_operand.vmem [shape: f32[8,128], index: 2, kind: input, shape index: {}]
  %s3 = inlined_call_operand.hbm [shape: f32[1,1], index: 3, kind: output, shape index: {}]
  %s4 = sld [smem:[#allocation0]]
  $region34: #{_lambda_.5} parent=0
    _
  %s6 = ssub.s32 1, %s4
  %s7 = scalar_select 0, %s6, %s4
  $region1: #{_lambda_.5} parent=0
    #allocation2 [shape = 'u8[512]{0}', space=vmem, size = 0x400, scoped, tag = 'output window, operand 0, single buffered']
    #allocation3 [shape = 's32[1]{0}', space=sflag, size = 0x4, scoped, tag = 'scoped memory for _lambda_.5']
    %8 = vsyncpa [#allocation3], 0
    // Predicated region
    $region2: #{_lambda_.5} parent=1 // pred_check
      _
    $region3: #{_lambda_.5} parent=1 // pred_check_branch
      %10 = sbr.rel (0) target = $region5
    $region4: #{_lambda_.5} parent=1 // pred_region
      _
    $region5: #{_lambda_.5} parent=1 // pred_fallthru
      _
    // Predicated region
    $region6: #{_lambda_.5} parent=1 // pred_check
      _
    $region7: #{_lambda_.5} parent=1 // pred_check_branch
      %12 = sbr.rel (0) target = $region9
    $region8: #{_lambda_.5} parent=1 // pred_region
      _
    $region9: #{_lambda_.5} parent=1 // pred_fallthru
      _
    // Predicated region
    $region10: #{_lambda_.5} parent=1 // pred_check
      _
    $region11: #{_lambda_.5} parent=1 // pred_check_branch
      %14 = sbr.rel (0) target = $region13
    $region12: #{_lambda_.5} parent=1 // pred_region
      _
    $region13: #{_lambda_.5} parent=1 // pred_fallthru
      _
    %p15 = scmp.eq.s32.totalorder 0, 0
    %p16 = scmp.eq.s32.totalorder 0, 0
    %p17 = pnand %p15, %p16
    %p18 = pneg %p17
    // Predicated region
    $region14: #{_lambda_.5} parent=1 // pred_check
      _
    $region15: #{_lambda_.5} parent=1 // pred_check_branch
      %20 = sbr.rel (%p17) target = $region17
    $region16: #{_lambda_.5} parent=1 // pred_region
      %vm21 = vcmask 0
      %22 = vst.msk [vmem:[#allocation2] sm:$0x1] %vm21, 0.0
    $region17: #{_lambda_.5} parent=1 // pred_fallthru
      _
    %v23 = vld [vmem:[%s0] sm:$0xff]
    %v24 = vld [vmem:[%s2] sm:$0xff]
    %25 = vmatprep.subr.mxu0 0.0
    %26 = vmatpush1.xpose.msra.mxu0 0.0
    %27 = vmatprep.subr.mxu0 0.0
    %28 = vmatpush1.xpose.msra.mxu0 0.0
    %29 = vmatprep.subr.mxu0 0.0
    %30 = vmatpush1.xpose.msra.mxu0 0.0
    %31 = vmatprep.subr.mxu0 0.0
    %32 = vmatpush1.xpose.msra.mxu0 0.0
    %33 = vmatprep.subr.mxu0 0.0
    %34 = vmatpush1.xpose.msra.mxu0 0.0
    %35 = vmatprep.subr.mxu0 0.0
    %36 = vmatpush1.xpose.msra.mxu0 0.0
    %37 = vmatprep.subr.mxu0 0.0
    %38 = vmatpush1.xpose.msra.mxu0 0.0
    %39 = vmatprep.subr.mxu0 0.0
    %40 = vmatpush1.xpose.msra.mxu0 0.0
    %41 = vmatprep.subr.mxu0 0.0
    %42 = vmatpush1.xpose.msra.mxu0 0.0
    %43 = vmatprep.subr.mxu0 0.0
    %44 = vmatpush1.xpose.msra.mxu0 0.0
    %45 = vmatprep.subr.mxu0 0.0
    %46 = vmatpush1.xpose.msra.mxu0 0.0
    %47 = vmatprep.subr.mxu0 0.0
    %48 = vmatpush1.xpose.msra.mxu0 0.0
    %49 = vmatprep.subr.mxu0 0.0
    %50 = vmatpush1.xpose.msra.mxu0 0.0
    %51 = vmatprep.subr.mxu0 0.0
    %52 = vmatpush1.xpose.msra.mxu0 0.0
    %53 = vmatprep.subr.mxu0 0.0
    %54 = vmatpush1.xpose.msra.mxu0 0.0
    %55 = vmatprep.subr.mxu0 0.0
    %56 = vmatpush1.xpose.msra.mxu0 %v24
    %57 = vmatprep.subr.mxu0 0.0
    %58 = vmatpush2.xpose.msra.mxu0 0.0
    %59 = vmatprep.subr.mxu0 0.0
    %60 = vmatpush2.xpose.msra.mxu0 0.0
    %61 = vmatprep.subr.mxu0 0.0
    %62 = vmatpush2.xpose.msra.mxu0 0.0
    %63 = vmatprep.subr.mxu0 0.0
    %64 = vmatpush2.xpose.msra.mxu0 0.0
    %65 = vmatprep.subr.mxu0 0.0
    %66 = vmatpush2.xpose.msra.mxu0 0.0
    %67 = vmatprep.subr.mxu0 0.0
    %68 = vmatpush2.xpose.msra.mxu0 0.0
    %69 = vmatprep.subr.mxu0 0.0
    %70 = vmatpush2.xpose.msra.mxu0 0.0
    %71 = vmatprep.subr.mxu0 0.0
    %72 = vmatpush2.xpose.msra.mxu0 0.0
    %73 = vmatprep.subr.mxu0 0.0
    %74 = vmatpush2.xpose.msra.mxu0 0.0
    %75 = vmatprep.subr.mxu0 0.0
    %76 = vmatpush2.xpose.msra.mxu0 0.0
    %77 = vmatprep.subr.mxu0 0.0
    %78 = vmatpush2.xpose.msra.mxu0 0.0
    %79 = vmatprep.subr.mxu0 0.0
    %80 = vmatpush2.xpose.msra.mxu0 0.0
    %81 = vmatprep.subr.mxu0 0.0
    %82 = vmatpush2.xpose.msra.mxu0 0.0
    %83 = vmatprep.subr.mxu0 0.0
    %84 = vmatpush2.xpose.msra.mxu0 0.0
    %85 = vmatprep.subr.mxu0 0.0
    %86 = vmatpush2.xpose.msra.mxu0 0.0
    %87 = vmatprep.subr.mxu0 0.0
    %88 = vmatpush2.xpose.msra.mxu0 0.0
    %89 = vmatprep.mubr.f32.mxu0 0.0
    %90 = vmatmul.mubr.f32.gmra.mxu0 %v23
    %v91 = vpop.f32.mrf.mxu0
    %v92 = vadd.f32 0.0, %v91
    %v93 = vpop.f32.mrf.mxu0
    %94 = vdwg.mxu0
    %v95 = vld [vmem:[#allocation2] sm:$0x1]
    %v96 = vmul.f32 %v92, %v92
    %vm97 = vcmask 64512
    %v98 = vsel %vm97, %v96, 0.0
    %99 = vadd.xlane.f32.xlu0 %v98
    %v100 = vpop.xlane.xlu0 %99
    %v101 = vrot.slane %v100, 4
    %v102 = vadd.f32 %v100, %v101
    %v103 = vrot.slane %v102, 2
    %v104 = vadd.f32 %v102, %v103
    %v105 = vrot.slane %v104, 1
    %v106 = vadd.f32 %v104, %v105
    %s107 = vtos %v106
    %v108 = vstv %s107
    %v109 = vmul.f32 %v108, 0.017857144
    %v110 = vadd.f32 %v95, %v109
    %vm111 = vcmask 0
    %112 = vst.msk [vmem:[#allocation2] sm:$0x1] %vm111, %v110
    %p113 = scmp.le.s32.totalorder 0, 0
    // Predicated region
    $region18: #{_lambda_.5} parent=1 // pred_check
      %p114 = pneg %p113
    $region19: #{_lambda_.5} parent=1 // pred_check_branch
      %116 = sbr.rel (%p114) target = $region21
    $region20: #{_lambda_.5} parent=1 // pred_region
      %v117 = vld [vmem:[%s1] sm:$0xff]
      %118 = vmatprep.subr.mxu0 0.0
      %119 = vmatpush1.xpose.msra.mxu0 0.0
      %120 = vmatprep.subr.mxu0 0.0
      %121 = vmatpush1.xpose.msra.mxu0 0.0
      %122 = vmatprep.subr.mxu0 0.0
      %123 = vmatpush1.xpose.msra.mxu0 0.0
      %124 = vmatprep.subr.mxu0 0.0
      %125 = vmatpush1.xpose.msra.mxu0 0.0
      %126 = vmatprep.subr.mxu0 0.0
      %127 = vmatpush1.xpose.msra.mxu0 0.0
      %128 = vmatprep.subr.mxu0 0.0
      %129 = vmatpush1.xpose.msra.mxu0 0.0
      %130 = vmatprep.subr.mxu0 0.0
      %131 = vmatpush1.xpose.msra.mxu0 0.0
      %132 = vmatprep.subr.mxu0 0.0
      %133 = vmatpush1.xpose.msra.mxu0 0.0
      %134 = vmatprep.subr.mxu0 0.0
      %135 = vmatpush1.xpose.msra.mxu0 0.0
      %136 = vmatprep.subr.mxu0 0.0
      %137 = vmatpush1.xpose.msra.mxu0 0.0
      %138 = vmatprep.subr.mxu0 0.0
      %139 = vmatpush1.xpose.msra.mxu0 0.0
      %140 = vmatprep.subr.mxu0 0.0
      %141 = vmatpush1.xpose.msra.mxu0 0.0
      %142 = vmatprep.subr.mxu0 0.0
      %143 = vmatpush1.xpose.msra.mxu0 0.0
      %144 = vmatprep.subr.mxu0 0.0
      %145 = vmatpush1.xpose.msra.mxu0 0.0
      %146 = vmatprep.subr.mxu0 0.0
      %147 = vmatpush1.xpose.msra.mxu0 0.0
      %148 = vmatprep.subr.mxu0 0.0
      %149 = vmatpush1.xpose.msra.mxu0 %v117
      %150 = vmatprep.subr.mxu0 0.0
      %151 = vmatpush2.xpose.msra.mxu0 0.0
      %152 = vmatprep.subr.mxu0 0.0
      %153 = vmatpush2.xpose.msra.mxu0 0.0
      %154 = vmatprep.subr.mxu0 0.0
      %155 = vmatpush2.xpose.msra.mxu0 0.0
      %156 = vmatprep.subr.mxu0 0.0
      %157 = vmatpush2.xpose.msra.mxu0 0.0
      %158 = vmatprep.subr.mxu0 0.0
      %159 = vmatpush2.xpose.msra.mxu0 0.0
      %160 = vmatprep.subr.mxu0 0.0
      %161 = vmatpush2.xpose.msra.mxu0 0.0
      %162 = vmatprep.subr.mxu0 0.0
      %163 = vmatpush2.xpose.msra.mxu0 0.0
      %164 = vmatprep.subr.mxu0 0.0
      %165 = vmatpush2.xpose.msra.mxu0 0.0
      %166 = vmatprep.subr.mxu0 0.0
      %167 = vmatpush2.xpose.msra.mxu0 0.0
      %168 = vmatprep.subr.mxu0 0.0
      %169 = vmatpush2.xpose.msra.mxu0 0.0
      %170 = vmatprep.subr.mxu0 0.0
      %171 = vmatpush2.xpose.msra.mxu0 0.0
      %172 = vmatprep.subr.mxu0 0.0
      %173 = vmatpush2.xpose.msra.mxu0 0.0
      %174 = vmatprep.subr.mxu0 0.0
      %175 = vmatpush2.xpose.msra.mxu0 0.0
      %176 = vmatprep.subr.mxu0 0.0
      %177 = vmatpush2.xpose.msra.mxu0 0.0
      %178 = vmatprep.subr.mxu0 0.0
      %179 = vmatpush2.xpose.msra.mxu0 0.0
      %180 = vmatprep.subr.mxu0 0.0
      %181 = vmatpush2.xpose.msra.mxu0 0.0
      %182 = vmatprep.mubr.f32.mxu0 0.0
      %183 = vmatmul.mubr.f32.gmra.mxu0 %v23
      %v184 = vpop.f32.mrf.mxu0
      %v185 = vadd.f32 0.0, %v184
      %v186 = vpop.f32.mrf.mxu0
      %187 = vdwg.mxu0
      %p188 = scmp.eq.s32.totalorder 0, 0
      %s189 = scalar_select %p188, 0.017857144, 0.035714287
      %v190 = vld [vmem:[#allocation2] sm:$0x1]
      %v191 = vmul.f32 %v185, %v185
      %v192 = vsel %vm97, %v191, 0.0
      %193 = vadd.xlane.f32.xlu0 %v192
      %v194 = vpop.xlane.xlu0 %193
      %v195 = vrot.slane %v194, 4
      %v196 = vadd.f32 %v194, %v195
      %v197 = vrot.slane %v196, 2
      %v198 = vadd.f32 %v196, %v197
      %v199 = vrot.slane %v198, 1
      %v200 = vadd.f32 %v198, %v199
      %s201 = vtos %v200
      %v202 = vstv %s201
      %v203 = vstv %s189
      %v204 = vmul.f32 %v202, %v203
      %v205 = vadd.f32 %v190, %v204
      %206 = vst.msk [vmem:[#allocation2] sm:$0x1] %vm111, %v205
    $region21: #{_lambda_.5} parent=1 // pred_fallthru
      _
    %p207 = scmp.eq.s32.totalorder 0, 0
    // Predicated region
    $region22: #{_lambda_.5} parent=1 // pred_check
      %p208 = pneg %p207
    $region23: #{_lambda_.5} parent=1 // pred_check_branch
      %210 = sbr.rel (%p208) target = $region25
    $region24: #{_lambda_.5} parent=1 // pred_region
      %v211 = vmul.f32 %v23, %v24
      %212 = vadd.xlane.f32.xlu0 %v211
      %v213 = vpop.xlane.xlu0 %212
      %v214 = vmul.f32 %v23, %v23
      %215 = vadd.xlane.f32.xlu0 %v214
      %v216 = vpop.xlane.xlu0 %215
      %v217 = vadd.f32 %v213, %v216
      %v218 = vrot.slane %v217, 4
      %v219 = vadd.f32 %v217, %v218
      %v220 = vrot.slane %v219, 2
      %v221 = vadd.f32 %v219, %v220
      %v222 = vrot.slane %v221, 1
      %v223 = vadd.f32 %v221, %v222
      %v224 = vmul.f32 %v213, %v213
      %v225 = vmul.f32 %v216, %v216
      %v226 = vadd.f32 %v224, %v225
      %v227 = vrot.slane %v226, 4
      %v228 = vadd.f32 %v226, %v227
      %v229 = vrot.slane %v228, 2
      %v230 = vadd.f32 %v228, %v229
      %v231 = vrot.slane %v230, 1
      %v232 = vadd.f32 %v230, %v231
      %v233 = vld [vmem:[#allocation2] sm:$0x1]
      %v234 = vmul.f32 %v223, -0.25
      %v235 = vmul.f32 %v232, 0.017857144
      %v236 = vsub.f32 %v234, %v235
      %v237 = vadd.f32 %v233, %v236
      %238 = vst.msk [vmem:[#allocation2] sm:$0x1] %vm111, %v237
    $region25: #{_lambda_.5} parent=1 // pred_fallthru
      _
    // Predicated region
    $region26: #{_lambda_.5} parent=1 // pred_check
      _
    $region27: #{_lambda_.5} parent=1 // pred_check_branch
      %240 = sbr.rel (0) target = $region29
    $region28: #{_lambda_.5} parent=1 // pred_region
      %s242 = ssub.s32 16, 16
      %243 = vsyncadd [#allocation3], %s242
      %s245 = sshll.u32 [#allocation2], 4
      %s246 = int_to_ptr.vmem [resolvable:$true] %s245
      %248 = dma.vmem_to_hbm [thread:$0]  %s246, 16, %s3, [#allocation3]
    $region29: #{_lambda_.5} parent=1 // pred_fallthru
      _
    // Predicated region
    $region30: #{_lambda_.5} parent=1 // pred_check
      _
    $region31: #{_lambda_.5} parent=1 // pred_check_branch
      %250 = sbr.rel (0) target = $region33
    $region32: #{_lambda_.5} parent=1 // pred_region
      %251 = dma.done [#allocation3], 16
    $region33: #{_lambda_.5} parent=1 // pred_fallthru
      _
    %252 = vsyncpa [#allocation3], 1

// kernel: _lambda_.3
$region0: #{_lambda_.3}
  #allocation0 [shape = 'u32[]', space=smem, size = 0x4, offset = 0x4, fixed_abs, tag = 'smem constant byte address 0x4 - core index']
  #allocation1 [shape = 'u32[144,128]{1,0:T(1,128)}', space=vmem, size = 0x12000, scoped, tag = 'internal scratch']
  %s0 = inlined_call_operand.vmem [shape: f32[8,16], index: 0, kind: input, shape index: {}]
  %s1 = inlined_call_operand.vmem [shape: f32[16,128], index: 1, kind: input, shape index: {}]
  %s2 = inlined_call_operand.vmem [shape: f32[8,8], index: 2, kind: input, shape index: {}]
  %s3 = inlined_call_operand.vmem [shape: f32[8,128], index: 3, kind: input, shape index: {}]
  %s4 = inlined_call_operand.vmem [shape: f32[4,128], index: 4, kind: input, shape index: {}]
  %s5 = inlined_call_operand.vmem [shape: f32[128,128], index: 5, kind: input, shape index: {}]
  %s6 = inlined_call_operand.vmem [shape: f32[128,128], index: 6, kind: input, shape index: {}]
  %s7 = inlined_call_operand.vmem [shape: f32[1,128], index: 7, kind: input, shape index: {}]
  %s8 = inlined_call_operand.vmem [shape: f32[8,128], index: 8, kind: output, shape index: {}]
  %s9 = sld [smem:[#allocation0]]
  $region42: #{_lambda_.3} parent=0
    _
  %s11 = ssub.s32 1, %s9
  %s12 = scalar_select 0, %s11, %s9
  // Predicated region
  $region2: #{_lambda_.3} parent=0 // pred_check
    _
  $region3: #{_lambda_.3} parent=0 // pred_check_branch
    %14 = sbr.rel (0) target = $region5
  $region4: #{_lambda_.3} parent=0 // pred_region
    _
  $region5: #{_lambda_.3} parent=0 // pred_fallthru
    _
  // Predicated region
  $region6: #{_lambda_.3} parent=0 // pred_check
    _
  $region7: #{_lambda_.3} parent=0 // pred_check_branch
    %16 = sbr.rel (0) target = $region9
  $region8: #{_lambda_.3} parent=0 // pred_region
    _
  $region9: #{_lambda_.3} parent=0 // pred_fallthru
    _
  // Predicated region
  $region10: #{_lambda_.3} parent=0 // pred_check
    _
  $region11: #{_lambda_.3} parent=0 // pred_check_branch
    %18 = sbr.rel (0) target = $region13
  $region12: #{_lambda_.3} parent=0 // pred_region
    _
  $region13: #{_lambda_.3} parent=0 // pred_fallthru
    _
  // Predicated region
  $region14: #{_lambda_.3} parent=0 // pred_check
    _
  $region15: #{_lambda_.3} parent=0 // pred_check_branch
    %20 = sbr.rel (0) target = $region17
  $region16: #{_lambda_.3} parent=0 // pred_region
    _
  $region17: #{_lambda_.3} parent=0 // pred_fallthru
    _
  // Predicated region
  $region18: #{_lambda_.3} parent=0 // pred_check
    _
  $region19: #{_lambda_.3} parent=0 // pred_check_branch
    %22 = sbr.rel (0) target = $region21
  $region20: #{_lambda_.3} parent=0 // pred_region
    _
  $region21: #{_lambda_.3} parent=0 // pred_fallthru
    _
  // Predicated region
  $region22: #{_lambda_.3} parent=0 // pred_check
    _
  $region23: #{_lambda_.3} parent=0 // pred_check_branch
    %24 = sbr.rel (0) target = $region25
  $region24: #{_lambda_.3} parent=0 // pred_region
    _
  $region25: #{_lambda_.3} parent=0 // pred_fallthru
    _
  // Predicated region
  $region26: #{_lambda_.3} parent=0 // pred_check
    _
  $region27: #{_lambda_.3} parent=0 // pred_check_branch
    %26 = sbr.rel (0) target = $region29
  $region28: #{_lambda_.3} parent=0 // pred_region
    _
  $region29: #{_lambda_.3} parent=0 // pred_fallthru
    _
  // Predicated region
  $region30: #{_lambda_.3} parent=0 // pred_check
    _
  $region31: #{_lambda_.3} parent=0 // pred_check_branch
    %28 = sbr.rel (0) target = $region33
  $region32: #{_lambda_.3} parent=0 // pred_region
    _
  $region33: #{_lambda_.3} parent=0 // pred_fallthru
    _
  %v29 = vld [vmem:[%s4] sm:$0xf]
  %v30 = vld [vmem:[%s0] sm:$0xff]
  %v31 = vld [vmem:[%s1] sm:$0xff]
  %v32 = vld [vmem:[%s1 + $0x8] sm:$0xff]
  %v33 = vld [vmem:[%s2] sm:$0xff]
  %v34 = vld [vmem:[%s3] sm:$0xff]
  %vm35 = vcmask 64512
  %v37 = vsel %vm35, %v33, 0
  %39 = vmatprep.subr.mxu0 0.0
  %40 = vmatpush1.msra.mxu0 0.0
  %41 = vmatprep.subr.mxu0 0.0
  %42 = vmatpush1.msra.mxu0 0.0
  %43 = vmatprep.subr.mxu0 0.0
  %44 = vmatpush1.msra.mxu0 0.0
  %45 = vmatprep.subr.mxu0 0.0
  %46 = vmatpush1.msra.mxu0 0.0
  %47 = vmatprep.subr.mxu0 0.0
  %48 = vmatpush1.msra.mxu0 0.0
  %49 = vmatprep.subr.mxu0 0.0
  %50 = vmatpush1.msra.mxu0 0.0
  %51 = vmatprep.subr.mxu0 0.0
  %52 = vmatpush1.msra.mxu0 0.0
  %53 = vmatprep.subr.mxu0 0.0
  %54 = vmatpush1.msra.mxu0 0.0
  %55 = vmatprep.subr.mxu0 0.0
  %56 = vmatpush1.msra.mxu0 0.0
  %57 = vmatprep.subr.mxu0 0.0
  %58 = vmatpush1.msra.mxu0 0.0
  %59 = vmatprep.subr.mxu0 0.0
  %60 = vmatpush1.msra.mxu0 0.0
  %61 = vmatprep.subr.mxu0 0.0
  %62 = vmatpush1.msra.mxu0 0.0
  %63 = vmatprep.subr.mxu0 0.0
  %64 = vmatpush1.msra.mxu0 0.0
  %65 = vmatprep.subr.mxu0 0.0
  %66 = vmatpush1.msra.mxu0 0.0
  %67 = vmatprep.subr.mxu0 0.0
  %68 = vmatpush1.msra.mxu0 0.0
  %69 = vmatprep.subr.mxu0 0.0
  %70 = vmatpush1.msra.mxu0 %v34
  %71 = vmatprep.subr.mxu0 0.0
  %72 = vmatpush2.msra.mxu0 0.0
  %73 = vmatprep.subr.mxu0 0.0
  %74 = vmatpush2.msra.mxu0 0.0
  %75 = vmatprep.subr.mxu0 0.0
  %76 = vmatpush2.msra.mxu0 0.0
  %77 = vmatprep.subr.mxu0 0.0
  %78 = vmatpush2.msra.mxu0 0.0
  %79 = vmatprep.subr.mxu0 0.0
  %80 = vmatpush2.msra.mxu0 0.0
  %81 = vmatprep.subr.mxu0 0.0
  %82 = vmatpush2.msra.mxu0 0.0
  %83 = vmatprep.subr.mxu0 0.0
  %84 = vmatpush2.msra.mxu0 0.0
  %85 = vmatprep.subr.mxu0 0.0
  %86 = vmatpush2.msra.mxu0 0.0
  %87 = vmatprep.subr.mxu0 0.0
  %88 = vmatpush2.msra.mxu0 0.0
  %89 = vmatprep.subr.mxu0 0.0
  %90 = vmatpush2.msra.mxu0 0.0
  %91 = vmatprep.subr.mxu0 0.0
  %92 = vmatpush2.msra.mxu0 0.0
  %93 = vmatprep.subr.mxu0 0.0
  %94 = vmatpush2.msra.mxu0 0.0
  %95 = vmatprep.subr.mxu0 0.0
  %96 = vmatpush2.msra.mxu0 0.0
  %97 = vmatprep.subr.mxu0 0.0
  %98 = vmatpush2.msra.mxu0 0.0
  %99 = vmatprep.subr.mxu0 0.0
  %100 = vmatpush2.msra.mxu0 0.0
  %101 = vmatprep.subr.mxu0 0.0
  %102 = vmatpush2.msra.mxu0 0.0
  %103 = vmatprep.mubr.f32.mxu0 0.0
  %104 = vmatmul.mubr.f32.gmra.mxu0 %v37
  %v105 = vpop.f32.mrf.mxu0
  %v106 = vadd.f32 0.0, %v105
  %v107 = vpop.f32.mrf.mxu0
  %108 = vdwg.mxu0
  %vm109 = vcmask 130048
  %v111 = vsel %vm109, %v30, 0
  %113 = vmatprep.subr.mxu0 0.0
  %114 = vmatpush1.msra.mxu0 0.0
  %115 = vmatprep.subr.mxu0 0.0
  %116 = vmatpush1.msra.mxu0 0.0
  %117 = vmatprep.subr.mxu0 0.0
  %118 = vmatpush1.msra.mxu0 0.0
  %119 = vmatprep.subr.mxu0 0.0
  %120 = vmatpush1.msra.mxu0 0.0
  %121 = vmatprep.subr.mxu0 0.0
  %122 = vmatpush1.msra.mxu0 0.0
  %123 = vmatprep.subr.mxu0 0.0
  %124 = vmatpush1.msra.mxu0 0.0
  %125 = vmatprep.subr.mxu0 0.0
  %126 = vmatpush1.msra.mxu0 0.0
  %127 = vmatprep.subr.mxu0 0.0
  %128 = vmatpush1.msra.mxu0 0.0
  %129 = vmatprep.subr.mxu0 0.0
  %130 = vmatpush1.msra.mxu0 0.0
  %131 = vmatprep.subr.mxu0 0.0
  %132 = vmatpush1.msra.mxu0 0.0
  %133 = vmatprep.subr.mxu0 0.0
  %134 = vmatpush1.msra.mxu0 0.0
  %135 = vmatprep.subr.mxu0 0.0
  %136 = vmatpush1.msra.mxu0 0.0
  %137 = vmatprep.subr.mxu0 0.0
  %138 = vmatpush1.msra.mxu0 0.0
  %139 = vmatprep.subr.mxu0 0.0
  %140 = vmatpush1.msra.mxu0 0.0
  %141 = vmatprep.subr.mxu0 0.0
  %142 = vmatpush1.msra.mxu0 %v32
  %143 = vmatprep.subr.mxu0 0.0
  %144 = vmatpush1.msra.mxu0 %v31
  %145 = vmatprep.subr.mxu0 0.0
  %146 = vmatpush2.msra.mxu0 0.0
  %147 = vmatprep.subr.mxu0 0.0
  %148 = vmatpush2.msra.mxu0 0.0
  %149 = vmatprep.subr.mxu0 0.0
  %150 = vmatpush2.msra.mxu0 0.0
  %151 = vmatprep.subr.mxu0 0.0
  %152 = vmatpush2.msra.mxu0 0.0
  %153 = vmatprep.subr.mxu0 0.0
  %154 = vmatpush2.msra.mxu0 0.0
  %155 = vmatprep.subr.mxu0 0.0
  %156 = vmatpush2.msra.mxu0 0.0
  %157 = vmatprep.subr.mxu0 0.0
  %158 = vmatpush2.msra.mxu0 0.0
  %159 = vmatprep.subr.mxu0 0.0
  %160 = vmatpush2.msra.mxu0 0.0
  %161 = vmatprep.subr.mxu0 0.0
  %162 = vmatpush2.msra.mxu0 0.0
  %163 = vmatprep.subr.mxu0 0.0
  %164 = vmatpush2.msra.mxu0 0.0
  %165 = vmatprep.subr.mxu0 0.0
  %166 = vmatpush2.msra.mxu0 0.0
  %167 = vmatprep.subr.mxu0 0.0
  %168 = vmatpush2.msra.mxu0 0.0
  %169 = vmatprep.subr.mxu0 0.0
  %170 = vmatpush2.msra.mxu0 0.0
  %171 = vmatprep.subr.mxu0 0.0
  %172 = vmatpush2.msra.mxu0 0.0
  %173 = vmatprep.subr.mxu0 0.0
  %174 = vmatpush2.msra.mxu0 0.0
  %175 = vmatprep.subr.mxu0 0.0
  %176 = vmatpush2.msra.mxu0 0.0
  %177 = vmatprep.mubr.f32.mxu0 0.0
  %178 = vmatmul.mubr.f32.gmra.mxu0 %v111
  %v179 = vpop.f32.mrf.mxu0
  %v180 = vadd.f32 %v106, %v179
  %v181 = vpop.f32.mrf.mxu0
  %182 = vdwg.mxu0
  %v183 = vlaneseq
  %v184 = vshrl.u32 %v183, 7
  %v185 = vsub.s32 0, %v184
  %v186 = vrot.slane %v29, %v185
  %v187 = vadd.f32 %v180, %v186
  %188 = vadd.xlane.f32.xlu0 %v187
  %v189 = vpop.xlane.xlu0 %188
  %v190 = vmul.f32 %v189, 0.03125
  %v191 = vmul.f32 %v187, %v187
  %192 = vadd.xlane.f32.xlu0 %v191
  %v193 = vpop.xlane.xlu0 %192
  %v194 = vmul.f32 %v193, 0.03125
  %v195 = vmul.f32 %v190, %v190
  %v196 = vsub.f32 %v194, %v195
  %v197 = vmax.f32 %v196, 0.0
  %v198 = vsub.f32 %v187, %v190
  %v199 = vadd.f32 %v197, 1e-05
  %v200 = vrsqrt.pop %v199
  %v201 = vmul.f32 %v198, %v200
  %v202 = vlaneseq
  %v203 = vshrl.u32 %v202, 7
  %v204 = vsub.s32 1, %v203
  %v205 = vrot.slane %v29, %v204
  %v206 = vmul.f32 %v201, %v205
  %v207 = vlaneseq
  %v208 = vshrl.u32 %v207, 7
  %v209 = vsub.s32 2, %v208
  %v210 = vrot.slane %v29, %v209
  %v211 = vadd.f32 %v206, %v210
  %v212 = vtanh.pop %v211
  %v213 = vld [vmem:[%s5] sm:$0xff]
  %v214 = vld [vmem:[%s5 + $0x8] sm:$0xff]
  %v215 = vld [vmem:[%s5 + $0x10] sm:$0xff]
  %v216 = vld [vmem:[%s5 + $0x18] sm:$0xff]
  %v217 = vld [vmem:[%s5 + $0x20] sm:$0xff]
  %v218 = vld [vmem:[%s5 + $0x28] sm:$0xff]
  %v219 = vld [vmem:[%s5 + $0x30] sm:$0xff]
  %v220 = vld [vmem:[%s5 + $0x38] sm:$0xff]
  %v221 = vld [vmem:[%s5 + $0x40] sm:$0xff]
  %v222 = vld [vmem:[%s5 + $0x48] sm:$0xff]
  %v223 = vld [vmem:[%s5 + $0x50] sm:$0xff]
  %v224 = vld [vmem:[%s5 + $0x58] sm:$0xff]
  %v225 = vld [vmem:[%s5 + $0x60] sm:$0xff]
  %v226 = vld [vmem:[%s5 + $0x68] sm:$0xff]
  %v227 = vld [vmem:[%s5 + $0x70] sm:$0xff]
  %v228 = vld [vmem:[%s5 + $0x78] sm:$0xff]
  %v229 = vlaneseq
  %v230 = vshrl.u32 %v229, 7
  %v231 = vsub.s32 3, %v230
  %v232 = vrot.slane %v29, %v231
  %233 = vmatprep.subr.mxu0 0.0
  %234 = vmatpush1.msra.mxu0 %v228
  %235 = vmatprep.subr.mxu0 0.0
  %236 = vmatpush1.msra.mxu0 %v227
  %237 = vmatprep.subr.mxu0 0.0
  %238 = vmatpush1.msra.mxu0 %v226
  %239 = vmatprep.subr.mxu0 0.0
  %240 = vmatpush1.msra.mxu0 %v225
  %241 = vmatprep.subr.mxu0 0.0
  %242 = vmatpush1.msra.mxu0 %v224
  %243 = vmatprep.subr.mxu0 0.0
  %244 = vmatpush1.msra.mxu0 %v223
  %245 = vmatprep.subr.mxu0 0.0
  %246 = vmatpush1.msra.mxu0 %v222
  %247 = vmatprep.subr.mxu0 0.0
  %248 = vmatpush1.msra.mxu0 %v221
  %249 = vmatprep.subr.mxu0 0.0
  %250 = vmatpush1.msra.mxu0 %v220
  %251 = vmatprep.subr.mxu0 0.0
  %252 = vmatpush1.msra.mxu0 %v219
  %253 = vmatprep.subr.mxu0 0.0
  %254 = vmatpush1.msra.mxu0 %v218
  %255 = vmatprep.subr.mxu0 0.0
  %256 = vmatpush1.msra.mxu0 %v217
  %257 = vmatprep.subr.mxu0 0.0
  %258 = vmatpush1.msra.mxu0 %v216
  %259 = vmatprep.subr.mxu0 0.0
  %260 = vmatpush1.msra.mxu0 %v215
  %261 = vmatprep.subr.mxu0 0.0
  %262 = vmatpush1.msra.mxu0 %v214
  %263 = vmatprep.subr.mxu0 0.0
  %264 = vmatpush1.msra.mxu0 %v213
  %265 = vmatprep.subr.mxu0 0.0
  %266 = vmatpush2.msra.mxu0 0.0
  %267 = vmatprep.subr.mxu0 0.0
  %268 = vmatpush2.msra.mxu0 0.0
  %269 = vmatprep.subr.mxu0 0.0
  %270 = vmatpush2.msra.mxu0 0.0
  %271 = vmatprep.subr.mxu0 0.0
  %272 = vmatpush2.msra.mxu0 0.0
  %273 = vmatprep.subr.mxu0 0.0
  %274 = vmatpush2.msra.mxu0 0.0
  %275 = vmatprep.subr.mxu0 0.0
  %276 = vmatpush2.msra.mxu0 0.0
  %277 = vmatprep.subr.mxu0 0.0
  %278 = vmatpush2.msra.mxu0 0.0
  %279 = vmatprep.subr.mxu0 0.0
  %280 = vmatpush2.msra.mxu0 0.0
  %281 = vmatprep.subr.mxu0 0.0
  %282 = vmatpush2.msra.mxu0 0.0
  %283 = vmatprep.subr.mxu0 0.0
  %284 = vmatpush2.msra.mxu0 0.0
  %285 = vmatprep.subr.mxu0 0.0
  %286 = vmatpush2.msra.mxu0 0.0
  %287 = vmatprep.subr.mxu0 0.0
  %288 = vmatpush2.msra.mxu0 0.0
  %289 = vmatprep.subr.mxu0 0.0
  %290 = vmatpush2.msra.mxu0 0.0
  %291 = vmatprep.subr.mxu0 0.0
  %292 = vmatpush2.msra.mxu0 0.0
  %293 = vmatprep.subr.mxu0 0.0
  %294 = vmatpush2.msra.mxu0 0.0
  %295 = vmatprep.subr.mxu0 0.0
  %296 = vmatpush2.msra.mxu0 0.0
  %297 = vmatprep.mubr.f32.mxu0 0.0
  %298 = vmatmul.mubr.f32.gmra.mxu0 %v212
  %v299 = vpop.f32.mrf.mxu0
  %v300 = vadd.f32 %v232, %v299
  %v301 = vpop.f32.mrf.mxu0
  %302 = vdwg.mxu0
  %v303 = vmax.f32 %v300, 0.0
  %v304 = vld [vmem:[%s6] sm:$0xff]
  %v305 = vld [vmem:[%s6 + $0x8] sm:$0xff]
  %v306 = vld [vmem:[%s6 + $0x10] sm:$0xff]
  %v307 = vld [vmem:[%s6 + $0x18] sm:$0xff]
  %v308 = vld [vmem:[%s6 + $0x20] sm:$0xff]
  %v309 = vld [vmem:[%s6 + $0x28] sm:$0xff]
  %v310 = vld [vmem:[%s6 + $0x30] sm:$0xff]
  %v311 = vld [vmem:[%s6 + $0x38] sm:$0xff]
  %v312 = vld [vmem:[%s6 + $0x40] sm:$0xff]
  %v313 = vld [vmem:[%s6 + $0x48] sm:$0xff]
  %v314 = vld [vmem:[%s6 + $0x50] sm:$0xff]
  %v315 = vld [vmem:[%s6 + $0x58] sm:$0xff]
  %v316 = vld [vmem:[%s6 + $0x60] sm:$0xff]
  %v317 = vld [vmem:[%s6 + $0x68] sm:$0xff]
  %v318 = vld [vmem:[%s6 + $0x70] sm:$0xff]
  %v319 = vld [vmem:[%s6 + $0x78] sm:$0xff]
  %v320 = vld [vmem:[%s7] sm:$0x1]
  %v322 = vlaneseq
  %v323 = vshrl.u32 %v322, 7
  %v324 = vsub.s32 0, %v323
  %v325 = vrot.slane %v320, %v324
  %327 = vmatprep.subr.mxu0 0.0
  %328 = vmatpush1.msra.mxu0 %v319
  %329 = vmatprep.subr.mxu0 0.0
  %330 = vmatpush1.msra.mxu0 %v318
  %331 = vmatprep.subr.mxu0 0.0
  %332 = vmatpush1.msra.mxu0 %v317
  %333 = vmatprep.subr.mxu0 0.0
  %334 = vmatpush1.msra.mxu0 %v316
  %335 = vmatprep.subr.mxu0 0.0
  %336 = vmatpush1.msra.mxu0 %v315
  %337 = vmatprep.subr.mxu0 0.0
  %338 = vmatpush1.msra.mxu0 %v314
  %339 = vmatprep.subr.mxu0 0.0
  %340 = vmatpush1.msra.mxu0 %v313
  %341 = vmatprep.subr.mxu0 0.0
  %342 = vmatpush1.msra.mxu0 %v312
  %343 = vmatprep.subr.mxu0 0.0
  %344 = vmatpush1.msra.mxu0 %v311
  %345 = vmatprep.subr.mxu0 0.0
  %346 = vmatpush1.msra.mxu0 %v310
  %347 = vmatprep.subr.mxu0 0.0
  %348 = vmatpush1.msra.mxu0 %v309
  %349 = vmatprep.subr.mxu0 0.0
  %350 = vmatpush1.msra.mxu0 %v308
  %351 = vmatprep.subr.mxu0 0.0
  %352 = vmatpush1.msra.mxu0 %v307
  %353 = vmatprep.subr.mxu0 0.0
  %354 = vmatpush1.msra.mxu0 %v306
  %355 = vmatprep.subr.mxu0 0.0
  %356 = vmatpush1.msra.mxu0 %v305
  %357 = vmatprep.subr.mxu0 0.0
  %358 = vmatpush1.msra.mxu0 %v304
  %359 = vmatprep.subr.mxu0 0.0
  %360 = vmatpush2.msra.mxu0 0.0
  %361 = vmatprep.subr.mxu0 0.0
  %362 = vmatpush2.msra.mxu0 0.0
  %363 = vmatprep.subr.mxu0 0.0
  %364 = vmatpush2.msra.mxu0 0.0
  %365 = vmatprep.subr.mxu0 0.0
  %366 = vmatpush2.msra.mxu0 0.0
  %367 = vmatprep.subr.mxu0 0.0
  %368 = vmatpush2.msra.mxu0 0.0
  %369 = vmatprep.subr.mxu0 0.0
  %370 = vmatpush2.msra.mxu0 0.0
  %371 = vmatprep.subr.mxu0 0.0
  %372 = vmatpush2.msra.mxu0 0.0
  %373 = vmatprep.subr.mxu0 0.0
  %374 = vmatpush2.msra.mxu0 0.0
  %375 = vmatprep.subr.mxu0 0.0
  %376 = vmatpush2.msra.mxu0 0.0
  %377 = vmatprep.subr.mxu0 0.0
  %378 = vmatpush2.msra.mxu0 0.0
  %379 = vmatprep.subr.mxu0 0.0
  %380 = vmatpush2.msra.mxu0 0.0
  %381 = vmatprep.subr.mxu0 0.0
  %382 = vmatpush2.msra.mxu0 0.0
  %383 = vmatprep.subr.mxu0 0.0
  %384 = vmatpush2.msra.mxu0 0.0
  %385 = vmatprep.subr.mxu0 0.0
  %386 = vmatpush2.msra.mxu0 0.0
  %387 = vmatprep.subr.mxu0 0.0
  %388 = vmatpush2.msra.mxu0 0.0
  %389 = vmatprep.subr.mxu0 0.0
  %390 = vmatpush2.msra.mxu0 0.0
  %391 = vmatprep.mubr.f32.mxu0 0.0
  %392 = vmatmul.mubr.f32.gmra.mxu0 %v303
  %v393 = vpop.f32.mrf.mxu0
  %v394 = vadd.f32 %v325, %v393
  %v395 = vpop.f32.mrf.mxu0
  %396 = vdwg.mxu0
  %v397 = vmul.f32 %v394, %v394
  %398 = vadd.xlane.f32.xlu0 %v397
  %v399 = vpop.xlane.xlu0 %398
  %v400 = vmax.f32 %v399, 1e-24
  %v401 = vrsqrt.pop %v400
  %v402 = vmul.f32 %v394, %v401
  %403 = vst [vmem:[%s8] sm:$0xff] %v402
  // Predicated region
  $region34: #{_lambda_.3} parent=0 // pred_check
    _
  $region35: #{_lambda_.3} parent=0 // pred_check_branch
    %405 = sbr.rel (0) target = $region37
  $region36: #{_lambda_.3} parent=0 // pred_region
    _
  $region37: #{_lambda_.3} parent=0 // pred_fallthru
    _
  // Predicated region
  $region38: #{_lambda_.3} parent=0 // pred_check
    _
  $region39: #{_lambda_.3} parent=0 // pred_check_branch
    %407 = sbr.rel (0) target = $region41
  $region40: #{_lambda_.3} parent=0 // pred_region
    _
  $region41: #{_lambda_.3} parent=0 // pred_fallthru
    _

</llo_original>
